<compile_context>
chip_gen: v6e
topology: v6e:2x2x1
jax: 0.10.0
libtpu: 0.0.40
codegen_flags: <defaults>
</compile_context>

<pallas_src>
import jax
import jax.numpy as jnp
from jax.experimental import pallas as pl
from jax.experimental.pallas import tpu as pltpu


def bilstm_kernel(x_ref, mmul_ref, madd_ref,
                  wih_ref, b_ref, whhf_ref, whhb_ref,
                  wpf_ref, wpb_ref, out_ref):
    """x_ref: (S*Bp, D); mmul/madd: (S*Bp, H); out_ref: (Bp, T)."""
    SB, _ = x_ref.shape
    H = whhf_ref.shape[0]
    Bp = out_ref.shape[0]
    S = SB // Bp
    NEG = -1e6

    # Hoisted input projection for BOTH directions + bias, one big MXU matmul.
    gin = (jnp.dot(x_ref[...], wih_ref[...],
                   preferred_element_type=jnp.float32)
           + b_ref[...])                                  # (S*Bp, 8H)

    mmul = mmul_ref[...]
    madd = madd_ref[...]
    whh_f = whhf_ref[...]
    whh_b = whhb_ref[...]

    def gate_act(gates):
        i_g = jax.nn.sigmoid(gates[:, 0:H])
        f_g = jax.nn.sigmoid(gates[:, H:2 * H])
        g_g = jnp.tanh(gates[:, 2 * H:3 * H])
        o_g = jax.nn.sigmoid(gates[:, 3 * H:4 * H])
        return i_g, f_g, g_g, o_g

    h_f = jnp.zeros((Bp, H), jnp.float32)
    c_f = jnp.zeros((Bp, H), jnp.float32)
    h_b = jnp.zeros((Bp, H), jnp.float32)
    c_b = jnp.zeros((Bp, H), jnp.float32)
    max_f = jnp.full((Bp, H), NEG, jnp.float32)
    max_b = jnp.full((Bp, H), NEG, jnp.float32)

    # Fused fwd+bwd recurrence, fully unrolled (S static, all slices static).
    for t in range(S):
        tb = S - 1 - t
        rf = slice(t * Bp, (t + 1) * Bp)
        rb = slice(tb * Bp, (tb + 1) * Bp)

        gates_f = gin[rf, 0:4 * H] + jnp.dot(
            h_f, whh_f, preferred_element_type=jnp.float32)
        gates_b = gin[rb, 4 * H:8 * H] + jnp.dot(
            h_b, whh_b, preferred_element_type=jnp.float32)

        i_f, f_f, g_f, o_f = gate_act(gates_f)
        i_b, f_b, g_b, o_b = gate_act(gates_b)

        m_f = mmul[rf]
        m_b = mmul[rb]
        c_f = (f_f * c_f + i_f * g_f) * m_f
        h_f = (o_f * jnp.tanh(c_f)) * m_f
        c_b = (f_b * c_b + i_b * g_b) * m_b
        h_b = (o_b * jnp.tanh(c_b)) * m_b

        max_f = jnp.maximum(max_f, h_f + madd[rf])
        max_b = jnp.maximum(max_b, h_b + madd[rb])

    # Projection without a lane-axis concat: split-weight dots + add.
    out_ref[...] = (jnp.dot(max_f, wpf_ref[...],
                            preferred_element_type=jnp.float32)
                    + jnp.dot(max_b, wpb_ref[...],
                              preferred_element_type=jnp.float32))


def bilstm_model_forward(words, extwords, masks, params):
    """Inference forward (training-only dropout is skipped)."""
    # Embedding gathers (plain-JAX glue).
    x_word = jnp.take(params["word_embed"], words, axis=0)       # (B, S, D)
    x_ext = jnp.take(params["extword_embed"], extwords, axis=0)  # (B, S, D)
    x_embed = (x_word + x_ext).astype(jnp.float32)
    # TODO(synk): drop_input_independent (bernoulli embedding dropout) is a
    # training-only path and is not executed at inference.

    B, S, D = x_embed.shape
    H = params["whh_f"].shape[0]
    T = params["wproj"].shape[1]

    # Pad batch to a multiple of 8 so every sublane / MXU row does real work.
    Bp = max(8, ((B + 7) // 8) * 8)
    pad = Bp - B
    m = masks.astype(jnp.float32)
    if pad:
        x_embed = jnp.pad(x_embed, ((0, pad), (0, 0), (0, 0)))
        m = jnp.pad(m, ((0, pad), (0, 0)))

    # Time-major flattened layouts; per-step row blocks are static slices.
    x_flat = jnp.transpose(x_embed, (1, 0, 2)).reshape(S * Bp, D)
    m_tm = jnp.transpose(m, (1, 0)).reshape(S * Bp, 1)
    mmul = jnp.broadcast_to(m_tm, (S * Bp, H)).astype(jnp.float32)
    madd = jnp.broadcast_to((m_tm - 1.0) * 1e6, (S * Bp, H)).astype(jnp.float32)

    # Pack both directions' input weights / biases; split the projection.
    wih_all = jnp.concatenate([params["wih_f"], params["wih_b"]], axis=1)  # (D, 8H)
    b_all = jnp.concatenate([params["b_f"], params["b_b"]], axis=1)        # (1, 8H)
    wproj_f = params["wproj"][:H]                                          # (H, T)
    wproj_b = params["wproj"][H:]                                          # (H, T)

    vmem = pl.BlockSpec(memory_space=pltpu.MemorySpace.VMEM)
    out = pl.pallas_call(
        bilstm_kernel,
        out_shape=jax.ShapeDtypeStruct((Bp, T), jnp.float32),
        in_specs=[vmem] * 9,
        out_specs=vmem,
    )(x_flat, mmul, madd, wih_all, b_all,
      params["whh_f"], params["whh_b"], wproj_f, wproj_b)
    # TODO(synk): at production sizes (large B/S), tile B with a "parallel"
    # grid axis (2 v7x TensorCores) and stream x via BlockSpec instead of
    # keeping it fully VMEM-resident.
    return out[:B]


def reference_forward(words, extwords, masks, params):
    """Pure-JAX reference mirroring the PyTorch forward semantics."""
    x = (jnp.take(params["word_embed"], words, axis=0)
         + jnp.take(params["extword_embed"], extwords, axis=0)).astype(jnp.float32)
    B, S, D = x.shape
    H = params["whh_f"].shape[0]
    m = masks.astype(jnp.float32)

    def run_dir(wih, whh, b, reverse):
        def step(carry, inp):
            h, c = carry
            x_t, m_t = inp
            gates = x_t @ wih + h @ whh + b
            i_g = jax.nn.sigmoid(gates[:, 0:H])
            f_g = jax.nn.sigmoid(gates[:, H:2 * H])
            g_g = jnp.tanh(gates[:, 2 * H:3 * H])
            o_g = jax.nn.sigmoid(gates[:, 3 * H:4 * H])
            c_new = (f_g * c + i_g * g_g) * m_t[:, None]
            h_new = (o_g * jnp.tanh(c_new)) * m_t[:, None]
            return (h_new, c_new), h_new

        xs = (jnp.transpose(x, (1, 0, 2)), jnp.transpose(m, (1, 0)))
        init = (jnp.zeros((B, H), jnp.float32), jnp.zeros((B, H), jnp.float32))
        _, hs = jax.lax.scan(step, init, xs, reverse=reverse)
        return hs                                                # (S, B, H)

    h_f = run_dir(params["wih_f"], params["whh_f"], params["b_f"][0], False)
    h_b = run_dir(params["wih_b"], params["whh_b"], params["b_b"][0], True)
    hiddens = jnp.concatenate([h_f, h_b], axis=-1)               # (S, B, 2H)
    hiddens = jnp.transpose(hiddens, (1, 0, 2))                  # (B, S, 2H)
    hiddens = hiddens + (m[:, :, None] - 1.0) * 1e6
    hidden = jnp.max(hiddens, axis=1)                            # (B, 2H)
    return hidden @ params["wproj"]


def make_params(key, vocab_size, extvocab_size, word_dims, hidden, tag_size):
    ks = jax.random.split(key, 8)
    scale = 0.1
    params = {
        # PyTorch module zero-initializes word_embed and copies pretrained
        # into extword_embed.
        "word_embed": jnp.zeros((vocab_size, word_dims), jnp.float32),
        "extword_embed": scale * jax.random.normal(
            ks[0], (extvocab_size, word_dims), jnp.float32),
        "wih_f": scale * jax.random.normal(ks[1], (word_dims, 4 * hidden), jnp.float32),
        "whh_f": scale * jax.random.normal(ks[2], (hidden, 4 * hidden), jnp.float32),
        "b_f": scale * jax.random.normal(ks[3], (1, 4 * hidden), jnp.float32),
        "wih_b": scale * jax.random.normal(ks[4], (word_dims, 4 * hidden), jnp.float32),
        "whh_b": scale * jax.random.normal(ks[5], (hidden, 4 * hidden), jnp.float32),
        "b_b": scale * jax.random.normal(ks[6], (1, 4 * hidden), jnp.float32),
        "wproj": scale * jax.random.normal(ks[7], (2 * hidden, tag_size), jnp.float32),
    }
    return params


if __name__ == "__main__":
    B, S = 2, 8
    word_dims = 32          # config.word_dims
    hidden = 32             # config.lstm_hiddens
    tag_size = 8            # vocab.tag_size
    vocab_size, extvocab_size = 50, 60

    key = jax.random.PRNGKey(0)
    kp, kw, ke = jax.random.split(key, 3)
    params = make_params(kp, vocab_size, extvocab_size, word_dims, hidden, tag_size)

    words = jax.random.randint(kw, (B, S), 1, vocab_size, dtype=jnp.int32)
    extwords = jax.random.randint(ke, (B, S), 1, extvocab_size, dtype=jnp.int32)
    lengths = jnp.array([S, 5], dtype=jnp.int32)
    masks = (jnp.arange(S)[None, :] < lengths[:, None]).astype(jnp.float32)  # (B, S)

    out = bilstm_model_forward(words, extwords, masks, params)
    out = jax.block_until_ready(out)

    ref = reference_forward(words, extwords, masks, params)
    assert out.shape == (B, tag_size)
    assert jnp.allclose(out, ref, atol=1e-3, rtol=1e-3), "mismatch vs reference"

    print("KERNEL_OK")
</pallas_src>

<mosaic_0001>
module attributes {stable_mosaic.version = 11 : i64} {
  func.func @bilstm_kernel(%arg0: memref<64x32xf32, #tpu.memory_space<vmem>>, %arg1: memref<64x32xf32, #tpu.memory_space<vmem>>, %arg2: memref<64x32xf32, #tpu.memory_space<vmem>>, %arg3: memref<32x256xf32, #tpu.memory_space<vmem>>, %arg4: memref<1x256xf32, #tpu.memory_space<vmem>>, %arg5: memref<32x128xf32, #tpu.memory_space<vmem>>, %arg6: memref<32x128xf32, #tpu.memory_space<vmem>>, %arg7: memref<32x8xf32, #tpu.memory_space<vmem>>, %arg8: memref<32x8xf32, #tpu.memory_space<vmem>>, %arg9: memref<8x8xf32, #tpu.memory_space<vmem>>) attributes {dimension_semantics = [], scalar_prefetch = 0 : i64, scratch_operands = 0 : i64, tpu.core_type = #tpu.core_type<tc>} {
    %c0 = arith.constant 0 : index
    %c0_0 = arith.constant 0 : index
    %0 = vector.load %arg0[%c0, %c0_0] : memref<64x32xf32, #tpu.memory_space<vmem>>, vector<64x32xf32>
    %c0_1 = arith.constant 0 : index
    %c0_2 = arith.constant 0 : index
    %1 = vector.load %arg3[%c0_1, %c0_2] : memref<32x256xf32, #tpu.memory_space<vmem>>, vector<32x256xf32>
    %cst = arith.constant dense<0.000000e+00> : vector<64x256xf32>
    %2 = tpu.matmul %0, %1, %cst {dimension_numbers = #tpu.dot_dimension_numbers<[1], [0], [0], [1], [0, 0, 1, 1], [], []>} : vector<64x32xf32>, vector<32x256xf32>, vector<64x256xf32> -> vector<64x256xf32>
    %c0_3 = arith.constant 0 : index
    %c0_4 = arith.constant 0 : index
    %3 = vector.load %arg4[%c0_3, %c0_4] : memref<1x256xf32, #tpu.memory_space<vmem>>, vector<1x256xf32>
    %4 = vector.broadcast %3 : vector<1x256xf32> to vector<64x256xf32>
    %5 = arith.addf %2, %4 : vector<64x256xf32>
    %c0_5 = arith.constant 0 : index
    %c0_6 = arith.constant 0 : index
    %6 = vector.load %arg1[%c0_5, %c0_6] : memref<64x32xf32, #tpu.memory_space<vmem>>, vector<64x32xf32>
    %c0_7 = arith.constant 0 : index
    %c0_8 = arith.constant 0 : index
    %7 = vector.load %arg2[%c0_7, %c0_8] : memref<64x32xf32, #tpu.memory_space<vmem>>, vector<64x32xf32>
    %c0_9 = arith.constant 0 : index
    %c0_10 = arith.constant 0 : index
    %8 = vector.load %arg5[%c0_9, %c0_10] : memref<32x128xf32, #tpu.memory_space<vmem>>, vector<32x128xf32>
    %c0_11 = arith.constant 0 : index
    %c0_12 = arith.constant 0 : index
    %9 = vector.load %arg6[%c0_11, %c0_12] : memref<32x128xf32, #tpu.memory_space<vmem>>, vector<32x128xf32>
    %cst_13 = arith.constant 0.000000e+00 : f32
    %10 = vector.broadcast %cst_13 : f32 to vector<8x32xf32>
    %cst_14 = arith.constant 0.000000e+00 : f32
    %11 = vector.broadcast %cst_14 : f32 to vector<8x32xf32>
    %cst_15 = arith.constant 0.000000e+00 : f32
    %12 = vector.broadcast %cst_15 : f32 to vector<8x32xf32>
    %cst_16 = arith.constant 0.000000e+00 : f32
    %13 = vector.broadcast %cst_16 : f32 to vector<8x32xf32>
    %cst_17 = arith.constant -1.000000e+06 : f32
    %14 = vector.broadcast %cst_17 : f32 to vector<8x32xf32>
    %cst_18 = arith.constant -1.000000e+06 : f32
    %15 = vector.broadcast %cst_18 : f32 to vector<8x32xf32>
    %16 = vector.extract_strided_slice %5 {offsets = [0, 0], sizes = [8, 128], strides = [1, 1]} : vector<64x256xf32> to vector<8x128xf32>
    %cst_19 = arith.constant dense<0.000000e+00> : vector<8x128xf32>
    %17 = tpu.matmul %10, %8, %cst_19 {dimension_numbers = #tpu.dot_dimension_numbers<[1], [0], [0], [1], [0, 0, 1, 1], [], []>} : vector<8x32xf32>, vector<32x128xf32>, vector<8x128xf32> -> vector<8x128xf32>
    %18 = arith.addf %16, %17 : vector<8x128xf32>
    %19 = vector.extract_strided_slice %5 {offsets = [56, 128], sizes = [8, 128], strides = [1, 1]} : vector<64x256xf32> to vector<8x128xf32>
    %cst_20 = arith.constant dense<0.000000e+00> : vector<8x128xf32>
    %20 = tpu.matmul %12, %9, %cst_20 {dimension_numbers = #tpu.dot_dimension_numbers<[1], [0], [0], [1], [0, 0, 1, 1], [], []>} : vector<8x32xf32>, vector<32x128xf32>, vector<8x128xf32> -> vector<8x128xf32>
    %21 = arith.addf %19, %20 : vector<8x128xf32>
    %22 = vector.extract_strided_slice %18 {offsets = [0, 0], sizes = [8, 32], strides = [1, 1]} : vector<8x128xf32> to vector<8x32xf32>
    %23 = arith.negf %22 : vector<8x32xf32>
    %24 = math.exp %23 : vector<8x32xf32>
    %cst_21 = arith.constant 1.000000e+00 : f32
    %25 = vector.broadcast %cst_21 : f32 to vector<8x32xf32>
    %26 = arith.addf %25, %24 : vector<8x32xf32>
    %27 = arith.divf %25, %26 : vector<8x32xf32>
    %28 = vector.extract_strided_slice %18 {offsets = [0, 32], sizes = [8, 32], strides = [1, 1]} : vector<8x128xf32> to vector<8x32xf32>
    %29 = arith.negf %28 : vector<8x32xf32>
    %30 = math.exp %29 : vector<8x32xf32>
    %cst_22 = arith.constant 1.000000e+00 : f32
    %31 = vector.broadcast %cst_22 : f32 to vector<8x32xf32>
    %32 = arith.addf %31, %30 : vector<8x32xf32>
    %33 = arith.divf %31, %32 : vector<8x32xf32>
    %34 = vector.extract_strided_slice %18 {offsets = [0, 64], sizes = [8, 32], strides = [1, 1]} : vector<8x128xf32> to vector<8x32xf32>
    %35 = math.tanh %34 : vector<8x32xf32>
    %36 = vector.extract_strided_slice %18 {offsets = [0, 96], sizes = [8, 32], strides = [1, 1]} : vector<8x128xf32> to vector<8x32xf32>
    %37 = arith.negf %36 : vector<8x32xf32>
    %38 = math.exp %37 : vector<8x32xf32>
    %cst_23 = arith.constant 1.000000e+00 : f32
    %39 = vector.broadcast %cst_23 : f32 to vector<8x32xf32>
    %40 = arith.addf %39, %38 : vector<8x32xf32>
    %41 = arith.divf %39, %40 : vector<8x32xf32>
    %42 = vector.extract_strided_slice %21 {offsets = [0, 0], sizes = [8, 32], strides = [1, 1]} : vector<8x128xf32> to vector<8x32xf32>
    %43 = arith.negf %42 : vector<8x32xf32>
    %44 = math.exp %43 : vector<8x32xf32>
    %cst_24 = arith.constant 1.000000e+00 : f32
    %45 = vector.broadcast %cst_24 : f32 to vector<8x32xf32>
    %46 = arith.addf %45, %44 : vector<8x32xf32>
    %47 = arith.divf %45, %46 : vector<8x32xf32>
    %48 = vector.extract_strided_slice %21 {offsets = [0, 32], sizes = [8, 32], strides = [1, 1]} : vector<8x128xf32> to vector<8x32xf32>
    %49 = arith.negf %48 : vector<8x32xf32>
    %50 = math.exp %49 : vector<8x32xf32>
    %cst_25 = arith.constant 1.000000e+00 : f32
    %51 = vector.broadcast %cst_25 : f32 to vector<8x32xf32>
    %52 = arith.addf %51, %50 : vector<8x32xf32>
    %53 = arith.divf %51, %52 : vector<8x32xf32>
    %54 = vector.extract_strided_slice %21 {offsets = [0, 64], sizes = [8, 32], strides = [1, 1]} : vector<8x128xf32> to vector<8x32xf32>
    %55 = math.tanh %54 : vector<8x32xf32>
    %56 = vector.extract_strided_slice %21 {offsets = [0, 96], sizes = [8, 32], strides = [1, 1]} : vector<8x128xf32> to vector<8x32xf32>
    %57 = arith.negf %56 : vector<8x32xf32>
    %58 = math.exp %57 : vector<8x32xf32>
    %cst_26 = arith.constant 1.000000e+00 : f32
    %59 = vector.broadcast %cst_26 : f32 to vector<8x32xf32>
    %60 = arith.addf %59, %58 : vector<8x32xf32>
    %61 = arith.divf %59, %60 : vector<8x32xf32>
    %62 = vector.extract_strided_slice %6 {offsets = [0, 0], sizes = [8, 32], strides = [1, 1]} : vector<64x32xf32> to vector<8x32xf32>
    %63 = vector.extract_strided_slice %6 {offsets = [56, 0], sizes = [8, 32], strides = [1, 1]} : vector<64x32xf32> to vector<8x32xf32>
    %64 = arith.mulf %33, %11 : vector<8x32xf32>
    %65 = arith.mulf %27, %35 : vector<8x32xf32>
    %66 = arith.addf %64, %65 : vector<8x32xf32>
    %67 = arith.mulf %66, %62 : vector<8x32xf32>
    %68 = math.tanh %67 : vector<8x32xf32>
    %69 = arith.mulf %41, %68 : vector<8x32xf32>
    %70 = arith.mulf %69, %62 : vector<8x32xf32>
    %71 = arith.mulf %53, %13 : vector<8x32xf32>
    %72 = arith.mulf %47, %55 : vector<8x32xf32>
    %73 = arith.addf %71, %72 : vector<8x32xf32>
    %74 = arith.mulf %73, %63 : vector<8x32xf32>
    %75 = math.tanh %74 : vector<8x32xf32>
    %76 = arith.mulf %61, %75 : vector<8x32xf32>
    %77 = arith.mulf %76, %63 : vector<8x32xf32>
    %78 = vector.extract_strided_slice %7 {offsets = [0, 0], sizes = [8, 32], strides = [1, 1]} : vector<64x32xf32> to vector<8x32xf32>
    %79 = arith.addf %70, %78 : vector<8x32xf32>
    %80 = arith.maximumf %14, %79 : vector<8x32xf32>
    %81 = vector.extract_strided_slice %7 {offsets = [56, 0], sizes = [8, 32], strides = [1, 1]} : vector<64x32xf32> to vector<8x32xf32>
    %82 = arith.addf %77, %81 : vector<8x32xf32>
    %83 = arith.maximumf %15, %82 : vector<8x32xf32>
    %84 = vector.extract_strided_slice %5 {offsets = [8, 0], sizes = [8, 128], strides = [1, 1]} : vector<64x256xf32> to vector<8x128xf32>
    %cst_27 = arith.constant dense<0.000000e+00> : vector<8x128xf32>
    %85 = tpu.matmul %70, %8, %cst_27 {dimension_numbers = #tpu.dot_dimension_numbers<[1], [0], [0], [1], [0, 0, 1, 1], [], []>} : vector<8x32xf32>, vector<32x128xf32>, vector<8x128xf32> -> vector<8x128xf32>
    %86 = arith.addf %84, %85 : vector<8x128xf32>
    %87 = vector.extract_strided_slice %5 {offsets = [48, 128], sizes = [8, 128], strides = [1, 1]} : vector<64x256xf32> to vector<8x128xf32>
    %cst_28 = arith.constant dense<0.000000e+00> : vector<8x128xf32>
    %88 = tpu.matmul %77, %9, %cst_28 {dimension_numbers = #tpu.dot_dimension_numbers<[1], [0], [0], [1], [0, 0, 1, 1], [], []>} : vector<8x32xf32>, vector<32x128xf32>, vector<8x128xf32> -> vector<8x128xf32>
    %89 = arith.addf %87, %88 : vector<8x128xf32>
    %90 = vector.extract_strided_slice %86 {offsets = [0, 0], sizes = [8, 32], strides = [1, 1]} : vector<8x128xf32> to vector<8x32xf32>
    %91 = arith.negf %90 : vector<8x32xf32>
    %92 = math.exp %91 : vector<8x32xf32>
    %cst_29 = arith.constant 1.000000e+00 : f32
    %93 = vector.broadcast %cst_29 : f32 to vector<8x32xf32>
    %94 = arith.addf %93, %92 : vector<8x32xf32>
    %95 = arith.divf %93, %94 : vector<8x32xf32>
    %96 = vector.extract_strided_slice %86 {offsets = [0, 32], sizes = [8, 32], strides = [1, 1]} : vector<8x128xf32> to vector<8x32xf32>
    %97 = arith.negf %96 : vector<8x32xf32>
    %98 = math.exp %97 : vector<8x32xf32>
    %cst_30 = arith.constant 1.000000e+00 : f32
    %99 = vector.broadcast %cst_30 : f32 to vector<8x32xf32>
    %100 = arith.addf %99, %98 : vector<8x32xf32>
    %101 = arith.divf %99, %100 : vector<8x32xf32>
    %102 = vector.extract_strided_slice %86 {offsets = [0, 64], sizes = [8, 32], strides = [1, 1]} : vector<8x128xf32> to vector<8x32xf32>
    %103 = math.tanh %102 : vector<8x32xf32>
    %104 = vector.extract_strided_slice %86 {offsets = [0, 96], sizes = [8, 32], strides = [1, 1]} : vector<8x128xf32> to vector<8x32xf32>
    %105 = arith.negf %104 : vector<8x32xf32>
    %106 = math.exp %105 : vector<8x32xf32>
    %cst_31 = arith.constant 1.000000e+00 : f32
    %107 = vector.broadcast %cst_31 : f32 to vector<8x32xf32>
    %108 = arith.addf %107, %106 : vector<8x32xf32>
    %109 = arith.divf %107, %108 : vector<8x32xf32>
    %110 = vector.extract_strided_slice %89 {offsets = [0, 0], sizes = [8, 32], strides = [1, 1]} : vector<8x128xf32> to vector<8x32xf32>
    %111 = arith.negf %110 : vector<8x32xf32>
    %112 = math.exp %111 : vector<8x32xf32>
    %cst_32 = arith.constant 1.000000e+00 : f32
    %113 = vector.broadcast %cst_32 : f32 to vector<8x32xf32>
    %114 = arith.addf %113, %112 : vector<8x32xf32>
    %115 = arith.divf %113, %114 : vector<8x32xf32>
    %116 = vector.extract_strided_slice %89 {offsets = [0, 32], sizes = [8, 32], strides = [1, 1]} : vector<8x128xf32> to vector<8x32xf32>
    %117 = arith.negf %116 : vector<8x32xf32>
    %118 = math.exp %117 : vector<8x32xf32>
    %cst_33 = arith.constant 1.000000e+00 : f32
    %119 = vector.broadcast %cst_33 : f32 to vector<8x32xf32>
    %120 = arith.addf %119, %118 : vector<8x32xf32>
    %121 = arith.divf %119, %120 : vector<8x32xf32>
    %122 = vector.extract_strided_slice %89 {offsets = [0, 64], sizes = [8, 32], strides = [1, 1]} : vector<8x128xf32> to vector<8x32xf32>
    %123 = math.tanh %122 : vector<8x32xf32>
    %124 = vector.extract_strided_slice %89 {offsets = [0, 96], sizes = [8, 32], strides = [1, 1]} : vector<8x128xf32> to vector<8x32xf32>
    %125 = arith.negf %124 : vector<8x32xf32>
    %126 = math.exp %125 : vector<8x32xf32>
    %cst_34 = arith.constant 1.000000e+00 : f32
    %127 = vector.broadcast %cst_34 : f32 to vector<8x32xf32>
    %128 = arith.addf %127, %126 : vector<8x32xf32>
    %129 = arith.divf %127, %128 : vector<8x32xf32>
    %130 = vector.extract_strided_slice %6 {offsets = [8, 0], sizes = [8, 32], strides = [1, 1]} : vector<64x32xf32> to vector<8x32xf32>
    %131 = vector.extract_strided_slice %6 {offsets = [48, 0], sizes = [8, 32], strides = [1, 1]} : vector<64x32xf32> to vector<8x32xf32>
    %132 = arith.mulf %101, %67 : vector<8x32xf32>
    %133 = arith.mulf %95, %103 : vector<8x32xf32>
    %134 = arith.addf %132, %133 : vector<8x32xf32>
    %135 = arith.mulf %134, %130 : vector<8x32xf32>
    %136 = math.tanh %135 : vector<8x32xf32>
    %137 = arith.mulf %109, %136 : vector<8x32xf32>
    %138 = arith.mulf %137, %130 : vector<8x32xf32>
    %139 = arith.mulf %121, %74 : vector<8x32xf32>
    %140 = arith.mulf %115, %123 : vector<8x32xf32>
    %141 = arith.addf %139, %140 : vector<8x32xf32>
    %142 = arith.mulf %141, %131 : vector<8x32xf32>
    %143 = math.tanh %142 : vector<8x32xf32>
    %144 = arith.mulf %129, %143 : vector<8x32xf32>
    %145 = arith.mulf %144, %131 : vector<8x32xf32>
    %146 = vector.extract_strided_slice %7 {offsets = [8, 0], sizes = [8, 32], strides = [1, 1]} : vector<64x32xf32> to vector<8x32xf32>
    %147 = arith.addf %138, %146 : vector<8x32xf32>
    %148 = arith.maximumf %80, %147 : vector<8x32xf32>
    %149 = vector.extract_strided_slice %7 {offsets = [48, 0], sizes = [8, 32], strides = [1, 1]} : vector<64x32xf32> to vector<8x32xf32>
    %150 = arith.addf %145, %149 : vector<8x32xf32>
    %151 = arith.maximumf %83, %150 : vector<8x32xf32>
    %152 = vector.extract_strided_slice %5 {offsets = [16, 0], sizes = [8, 128], strides = [1, 1]} : vector<64x256xf32> to vector<8x128xf32>
    %cst_35 = arith.constant dense<0.000000e+00> : vector<8x128xf32>
    %153 = tpu.matmul %138, %8, %cst_35 {dimension_numbers = #tpu.dot_dimension_numbers<[1], [0], [0], [1], [0, 0, 1, 1], [], []>} : vector<8x32xf32>, vector<32x128xf32>, vector<8x128xf32> -> vector<8x128xf32>
    %154 = arith.addf %152, %153 : vector<8x128xf32>
    %155 = vector.extract_strided_slice %5 {offsets = [40, 128], sizes = [8, 128], strides = [1, 1]} : vector<64x256xf32> to vector<8x128xf32>
    %cst_36 = arith.constant dense<0.000000e+00> : vector<8x128xf32>
    %156 = tpu.matmul %145, %9, %cst_36 {dimension_numbers = #tpu.dot_dimension_numbers<[1], [0], [0], [1], [0, 0, 1, 1], [], []>} : vector<8x32xf32>, vector<32x128xf32>, vector<8x128xf32> -> vector<8x128xf32>
    %157 = arith.addf %155, %156 : vector<8x128xf32>
    %158 = vector.extract_strided_slice %154 {offsets = [0, 0], sizes = [8, 32], strides = [1, 1]} : vector<8x128xf32> to vector<8x32xf32>
    %159 = arith.negf %158 : vector<8x32xf32>
    %160 = math.exp %159 : vector<8x32xf32>
    %cst_37 = arith.constant 1.000000e+00 : f32
    %161 = vector.broadcast %cst_37 : f32 to vector<8x32xf32>
    %162 = arith.addf %161, %160 : vector<8x32xf32>
    %163 = arith.divf %161, %162 : vector<8x32xf32>
    %164 = vector.extract_strided_slice %154 {offsets = [0, 32], sizes = [8, 32], strides = [1, 1]} : vector<8x128xf32> to vector<8x32xf32>
    %165 = arith.negf %164 : vector<8x32xf32>
    %166 = math.exp %165 : vector<8x32xf32>
    %cst_38 = arith.constant 1.000000e+00 : f32
    %167 = vector.broadcast %cst_38 : f32 to vector<8x32xf32>
    %168 = arith.addf %167, %166 : vector<8x32xf32>
    %169 = arith.divf %167, %168 : vector<8x32xf32>
    %170 = vector.extract_strided_slice %154 {offsets = [0, 64], sizes = [8, 32], strides = [1, 1]} : vector<8x128xf32> to vector<8x32xf32>
    %171 = math.tanh %170 : vector<8x32xf32>
    %172 = vector.extract_strided_slice %154 {offsets = [0, 96], sizes = [8, 32], strides = [1, 1]} : vector<8x128xf32> to vector<8x32xf32>
    %173 = arith.negf %172 : vector<8x32xf32>
    %174 = math.exp %173 : vector<8x32xf32>
    %cst_39 = arith.constant 1.000000e+00 : f32
    %175 = vector.broadcast %cst_39 : f32 to vector<8x32xf32>
    %176 = arith.addf %175, %174 : vector<8x32xf32>
    %177 = arith.divf %175, %176 : vector<8x32xf32>
    %178 = vector.extract_strided_slice %157 {offsets = [0, 0], sizes = [8, 32], strides = [1, 1]} : vector<8x128xf32> to vector<8x32xf32>
    %179 = arith.negf %178 : vector<8x32xf32>
    %180 = math.exp %179 : vector<8x32xf32>
    %cst_40 = arith.constant 1.000000e+00 : f32
    %181 = vector.broadcast %cst_40 : f32 to vector<8x32xf32>
    %182 = arith.addf %181, %180 : vector<8x32xf32>
    %183 = arith.divf %181, %182 : vector<8x32xf32>
    %184 = vector.extract_strided_slice %157 {offsets = [0, 32], sizes = [8, 32], strides = [1, 1]} : vector<8x128xf32> to vector<8x32xf32>
    %185 = arith.negf %184 : vector<8x32xf32>
    %186 = math.exp %185 : vector<8x32xf32>
    %cst_41 = arith.constant 1.000000e+00 : f32
    %187 = vector.broadcast %cst_41 : f32 to vector<8x32xf32>
    %188 = arith.addf %187, %186 : vector<8x32xf32>
    %189 = arith.divf %187, %188 : vector<8x32xf32>
    %190 = vector.extract_strided_slice %157 {offsets = [0, 64], sizes = [8, 32], strides = [1, 1]} : vector<8x128xf32> to vector<8x32xf32>
    %191 = math.tanh %190 : vector<8x32xf32>
    %192 = vector.extract_strided_slice %157 {offsets = [0, 96], sizes = [8, 32], strides = [1, 1]} : vector<8x128xf32> to vector<8x32xf32>
    %193 = arith.negf %192 : vector<8x32xf32>
    %194 = math.exp %193 : vector<8x32xf32>
    %cst_42 = arith.constant 1.000000e+00 : f32
    %195 = vector.broadcast %cst_42 : f32 to vector<8x32xf32>
    %196 = arith.addf %195, %194 : vector<8x32xf32>
    %197 = arith.divf %195, %196 : vector<8x32xf32>
    %198 = vector.extract_strided_slice %6 {offsets = [16, 0], sizes = [8, 32], strides = [1, 1]} : vector<64x32xf32> to vector<8x32xf32>
    %199 = vector.extract_strided_slice %6 {offsets = [40, 0], sizes = [8, 32], strides = [1, 1]} : vector<64x32xf32> to vector<8x32xf32>
    %200 = arith.mulf %169, %135 : vector<8x32xf32>
    %201 = arith.mulf %163, %171 : vector<8x32xf32>
    %202 = arith.addf %200, %201 : vector<8x32xf32>
    %203 = arith.mulf %202, %198 : vector<8x32xf32>
    %204 = math.tanh %203 : vector<8x32xf32>
    %205 = arith.mulf %177, %204 : vector<8x32xf32>
    %206 = arith.mulf %205, %198 : vector<8x32xf32>
    %207 = arith.mulf %189, %142 : vector<8x32xf32>
    %208 = arith.mulf %183, %191 : vector<8x32xf32>
    %209 = arith.addf %207, %208 : vector<8x32xf32>
    %210 = arith.mulf %209, %199 : vector<8x32xf32>
    %211 = math.tanh %210 : vector<8x32xf32>
    %212 = arith.mulf %197, %211 : vector<8x32xf32>
    %213 = arith.mulf %212, %199 : vector<8x32xf32>
    %214 = vector.extract_strided_slice %7 {offsets = [16, 0], sizes = [8, 32], strides = [1, 1]} : vector<64x32xf32> to vector<8x32xf32>
    %215 = arith.addf %206, %214 : vector<8x32xf32>
    %216 = arith.maximumf %148, %215 : vector<8x32xf32>
    %217 = vector.extract_strided_slice %7 {offsets = [40, 0], sizes = [8, 32], strides = [1, 1]} : vector<64x32xf32> to vector<8x32xf32>
    %218 = arith.addf %213, %217 : vector<8x32xf32>
    %219 = arith.maximumf %151, %218 : vector<8x32xf32>
    %220 = vector.extract_strided_slice %5 {offsets = [24, 0], sizes = [8, 128], strides = [1, 1]} : vector<64x256xf32> to vector<8x128xf32>
    %cst_43 = arith.constant dense<0.000000e+00> : vector<8x128xf32>
    %221 = tpu.matmul %206, %8, %cst_43 {dimension_numbers = #tpu.dot_dimension_numbers<[1], [0], [0], [1], [0, 0, 1, 1], [], []>} : vector<8x32xf32>, vector<32x128xf32>, vector<8x128xf32> -> vector<8x128xf32>
    %222 = arith.addf %220, %221 : vector<8x128xf32>
    %223 = vector.extract_strided_slice %5 {offsets = [32, 128], sizes = [8, 128], strides = [1, 1]} : vector<64x256xf32> to vector<8x128xf32>
    %cst_44 = arith.constant dense<0.000000e+00> : vector<8x128xf32>
    %224 = tpu.matmul %213, %9, %cst_44 {dimension_numbers = #tpu.dot_dimension_numbers<[1], [0], [0], [1], [0, 0, 1, 1], [], []>} : vector<8x32xf32>, vector<32x128xf32>, vector<8x128xf32> -> vector<8x128xf32>
    %225 = arith.addf %223, %224 : vector<8x128xf32>
    %226 = vector.extract_strided_slice %222 {offsets = [0, 0], sizes = [8, 32], strides = [1, 1]} : vector<8x128xf32> to vector<8x32xf32>
    %227 = arith.negf %226 : vector<8x32xf32>
    %228 = math.exp %227 : vector<8x32xf32>
    %cst_45 = arith.constant 1.000000e+00 : f32
    %229 = vector.broadcast %cst_45 : f32 to vector<8x32xf32>
    %230 = arith.addf %229, %228 : vector<8x32xf32>
    %231 = arith.divf %229, %230 : vector<8x32xf32>
    %232 = vector.extract_strided_slice %222 {offsets = [0, 32], sizes = [8, 32], strides = [1, 1]} : vector<8x128xf32> to vector<8x32xf32>
    %233 = arith.negf %232 : vector<8x32xf32>
    %234 = math.exp %233 : vector<8x32xf32>
    %cst_46 = arith.constant 1.000000e+00 : f32
    %235 = vector.broadcast %cst_46 : f32 to vector<8x32xf32>
    %236 = arith.addf %235, %234 : vector<8x32xf32>
    %237 = arith.divf %235, %236 : vector<8x32xf32>
    %238 = vector.extract_strided_slice %222 {offsets = [0, 64], sizes = [8, 32], strides = [1, 1]} : vector<8x128xf32> to vector<8x32xf32>
    %239 = math.tanh %238 : vector<8x32xf32>
    %240 = vector.extract_strided_slice %222 {offsets = [0, 96], sizes = [8, 32], strides = [1, 1]} : vector<8x128xf32> to vector<8x32xf32>
    %241 = arith.negf %240 : vector<8x32xf32>
    %242 = math.exp %241 : vector<8x32xf32>
    %cst_47 = arith.constant 1.000000e+00 : f32
    %243 = vector.broadcast %cst_47 : f32 to vector<8x32xf32>
    %244 = arith.addf %243, %242 : vector<8x32xf32>
    %245 = arith.divf %243, %244 : vector<8x32xf32>
    %246 = vector.extract_strided_slice %225 {offsets = [0, 0], sizes = [8, 32], strides = [1, 1]} : vector<8x128xf32> to vector<8x32xf32>
    %247 = arith.negf %246 : vector<8x32xf32>
    %248 = math.exp %247 : vector<8x32xf32>
    %cst_48 = arith.constant 1.000000e+00 : f32
    %249 = vector.broadcast %cst_48 : f32 to vector<8x32xf32>
    %250 = arith.addf %249, %248 : vector<8x32xf32>
    %251 = arith.divf %249, %250 : vector<8x32xf32>
    %252 = vector.extract_strided_slice %225 {offsets = [0, 32], sizes = [8, 32], strides = [1, 1]} : vector<8x128xf32> to vector<8x32xf32>
    %253 = arith.negf %252 : vector<8x32xf32>
    %254 = math.exp %253 : vector<8x32xf32>
    %cst_49 = arith.constant 1.000000e+00 : f32
    %255 = vector.broadcast %cst_49 : f32 to vector<8x32xf32>
    %256 = arith.addf %255, %254 : vector<8x32xf32>
    %257 = arith.divf %255, %256 : vector<8x32xf32>
    %258 = vector.extract_strided_slice %225 {offsets = [0, 64], sizes = [8, 32], strides = [1, 1]} : vector<8x128xf32> to vector<8x32xf32>
    %259 = math.tanh %258 : vector<8x32xf32>
    %260 = vector.extract_strided_slice %225 {offsets = [0, 96], sizes = [8, 32], strides = [1, 1]} : vector<8x128xf32> to vector<8x32xf32>
    %261 = arith.negf %260 : vector<8x32xf32>
    %262 = math.exp %261 : vector<8x32xf32>
    %cst_50 = arith.constant 1.000000e+00 : f32
    %263 = vector.broadcast %cst_50 : f32 to vector<8x32xf32>
    %264 = arith.addf %263, %262 : vector<8x32xf32>
    %265 = arith.divf %263, %264 : vector<8x32xf32>
    %266 = vector.extract_strided_slice %6 {offsets = [24, 0], sizes = [8, 32], strides = [1, 1]} : vector<64x32xf32> to vector<8x32xf32>
    %267 = vector.extract_strided_slice %6 {offsets = [32, 0], sizes = [8, 32], strides = [1, 1]} : vector<64x32xf32> to vector<8x32xf32>
    %268 = arith.mulf %237, %203 : vector<8x32xf32>
    %269 = arith.mulf %231, %239 : vector<8x32xf32>
    %270 = arith.addf %268, %269 : vector<8x32xf32>
    %271 = arith.mulf %270, %266 : vector<8x32xf32>
    %272 = math.tanh %271 : vector<8x32xf32>
    %273 = arith.mulf %245, %272 : vector<8x32xf32>
    %274 = arith.mulf %273, %266 : vector<8x32xf32>
    %275 = arith.mulf %257, %210 : vector<8x32xf32>
    %276 = arith.mulf %251, %259 : vector<8x32xf32>
    %277 = arith.addf %275, %276 : vector<8x32xf32>
    %278 = arith.mulf %277, %267 : vector<8x32xf32>
    %279 = math.tanh %278 : vector<8x32xf32>
    %280 = arith.mulf %265, %279 : vector<8x32xf32>
    %281 = arith.mulf %280, %267 : vector<8x32xf32>
    %282 = vector.extract_strided_slice %7 {offsets = [24, 0], sizes = [8, 32], strides = [1, 1]} : vector<64x32xf32> to vector<8x32xf32>
    %283 = arith.addf %274, %282 : vector<8x32xf32>
    %284 = arith.maximumf %216, %283 : vector<8x32xf32>
    %285 = vector.extract_strided_slice %7 {offsets = [32, 0], sizes = [8, 32], strides = [1, 1]} : vector<64x32xf32> to vector<8x32xf32>
    %286 = arith.addf %281, %285 : vector<8x32xf32>
    %287 = arith.maximumf %219, %286 : vector<8x32xf32>
    %288 = vector.extract_strided_slice %5 {offsets = [32, 0], sizes = [8, 128], strides = [1, 1]} : vector<64x256xf32> to vector<8x128xf32>
    %cst_51 = arith.constant dense<0.000000e+00> : vector<8x128xf32>
    %289 = tpu.matmul %274, %8, %cst_51 {dimension_numbers = #tpu.dot_dimension_numbers<[1], [0], [0], [1], [0, 0, 1, 1], [], []>} : vector<8x32xf32>, vector<32x128xf32>, vector<8x128xf32> -> vector<8x128xf32>
    %290 = arith.addf %288, %289 : vector<8x128xf32>
    %291 = vector.extract_strided_slice %5 {offsets = [24, 128], sizes = [8, 128], strides = [1, 1]} : vector<64x256xf32> to vector<8x128xf32>
    %cst_52 = arith.constant dense<0.000000e+00> : vector<8x128xf32>
    %292 = tpu.matmul %281, %9, %cst_52 {dimension_numbers = #tpu.dot_dimension_numbers<[1], [0], [0], [1], [0, 0, 1, 1], [], []>} : vector<8x32xf32>, vector<32x128xf32>, vector<8x128xf32> -> vector<8x128xf32>
    %293 = arith.addf %291, %292 : vector<8x128xf32>
    %294 = vector.extract_strided_slice %290 {offsets = [0, 0], sizes = [8, 32], strides = [1, 1]} : vector<8x128xf32> to vector<8x32xf32>
    %295 = arith.negf %294 : vector<8x32xf32>
    %296 = math.exp %295 : vector<8x32xf32>
    %cst_53 = arith.constant 1.000000e+00 : f32
    %297 = vector.broadcast %cst_53 : f32 to vector<8x32xf32>
    %298 = arith.addf %297, %296 : vector<8x32xf32>
    %299 = arith.divf %297, %298 : vector<8x32xf32>
    %300 = vector.extract_strided_slice %290 {offsets = [0, 32], sizes = [8, 32], strides = [1, 1]} : vector<8x128xf32> to vector<8x32xf32>
    %301 = arith.negf %300 : vector<8x32xf32>
    %302 = math.exp %301 : vector<8x32xf32>
    %cst_54 = arith.constant 1.000000e+00 : f32
    %303 = vector.broadcast %cst_54 : f32 to vector<8x32xf32>
    %304 = arith.addf %303, %302 : vector<8x32xf32>
    %305 = arith.divf %303, %304 : vector<8x32xf32>
    %306 = vector.extract_strided_slice %290 {offsets = [0, 64], sizes = [8, 32], strides = [1, 1]} : vector<8x128xf32> to vector<8x32xf32>
    %307 = math.tanh %306 : vector<8x32xf32>
    %308 = vector.extract_strided_slice %290 {offsets = [0, 96], sizes = [8, 32], strides = [1, 1]} : vector<8x128xf32> to vector<8x32xf32>
    %309 = arith.negf %308 : vector<8x32xf32>
    %310 = math.exp %309 : vector<8x32xf32>
    %cst_55 = arith.constant 1.000000e+00 : f32
    %311 = vector.broadcast %cst_55 : f32 to vector<8x32xf32>
    %312 = arith.addf %311, %310 : vector<8x32xf32>
    %313 = arith.divf %311, %312 : vector<8x32xf32>
    %314 = vector.extract_strided_slice %293 {offsets = [0, 0], sizes = [8, 32], strides = [1, 1]} : vector<8x128xf32> to vector<8x32xf32>
    %315 = arith.negf %314 : vector<8x32xf32>
    %316 = math.exp %315 : vector<8x32xf32>
    %cst_56 = arith.constant 1.000000e+00 : f32
    %317 = vector.broadcast %cst_56 : f32 to vector<8x32xf32>
    %318 = arith.addf %317, %316 : vector<8x32xf32>
    %319 = arith.divf %317, %318 : vector<8x32xf32>
    %320 = vector.extract_strided_slice %293 {offsets = [0, 32], sizes = [8, 32], strides = [1, 1]} : vector<8x128xf32> to vector<8x32xf32>
    %321 = arith.negf %320 : vector<8x32xf32>
    %322 = math.exp %321 : vector<8x32xf32>
    %cst_57 = arith.constant 1.000000e+00 : f32
    %323 = vector.broadcast %cst_57 : f32 to vector<8x32xf32>
    %324 = arith.addf %323, %322 : vector<8x32xf32>
    %325 = arith.divf %323, %324 : vector<8x32xf32>
    %326 = vector.extract_strided_slice %293 {offsets = [0, 64], sizes = [8, 32], strides = [1, 1]} : vector<8x128xf32> to vector<8x32xf32>
    %327 = math.tanh %326 : vector<8x32xf32>
    %328 = vector.extract_strided_slice %293 {offsets = [0, 96], sizes = [8, 32], strides = [1, 1]} : vector<8x128xf32> to vector<8x32xf32>
    %329 = arith.negf %328 : vector<8x32xf32>
    %330 = math.exp %329 : vector<8x32xf32>
    %cst_58 = arith.constant 1.000000e+00 : f32
    %331 = vector.broadcast %cst_58 : f32 to vector<8x32xf32>
    %332 = arith.addf %331, %330 : vector<8x32xf32>
    %333 = arith.divf %331, %332 : vector<8x32xf32>
    %334 = vector.extract_strided_slice %6 {offsets = [32, 0], sizes = [8, 32], strides = [1, 1]} : vector<64x32xf32> to vector<8x32xf32>
    %335 = vector.extract_strided_slice %6 {offsets = [24, 0], sizes = [8, 32], strides = [1, 1]} : vector<64x32xf32> to vector<8x32xf32>
    %336 = arith.mulf %305, %271 : vector<8x32xf32>
    %337 = arith.mulf %299, %307 : vector<8x32xf32>
    %338 = arith.addf %336, %337 : vector<8x32xf32>
    %339 = arith.mulf %338, %334 : vector<8x32xf32>
    %340 = math.tanh %339 : vector<8x32xf32>
    %341 = arith.mulf %313, %340 : vector<8x32xf32>
    %342 = arith.mulf %341, %334 : vector<8x32xf32>
    %343 = arith.mulf %325, %278 : vector<8x32xf32>
    %344 = arith.mulf %319, %327 : vector<8x32xf32>
    %345 = arith.addf %343, %344 : vector<8x32xf32>
    %346 = arith.mulf %345, %335 : vector<8x32xf32>
    %347 = math.tanh %346 : vector<8x32xf32>
    %348 = arith.mulf %333, %347 : vector<8x32xf32>
    %349 = arith.mulf %348, %335 : vector<8x32xf32>
    %350 = vector.extract_strided_slice %7 {offsets = [32, 0], sizes = [8, 32], strides = [1, 1]} : vector<64x32xf32> to vector<8x32xf32>
    %351 = arith.addf %342, %350 : vector<8x32xf32>
    %352 = arith.maximumf %284, %351 : vector<8x32xf32>
    %353 = vector.extract_strided_slice %7 {offsets = [24, 0], sizes = [8, 32], strides = [1, 1]} : vector<64x32xf32> to vector<8x32xf32>
    %354 = arith.addf %349, %353 : vector<8x32xf32>
    %355 = arith.maximumf %287, %354 : vector<8x32xf32>
    %356 = vector.extract_strided_slice %5 {offsets = [40, 0], sizes = [8, 128], strides = [1, 1]} : vector<64x256xf32> to vector<8x128xf32>
    %cst_59 = arith.constant dense<0.000000e+00> : vector<8x128xf32>
    %357 = tpu.matmul %342, %8, %cst_59 {dimension_numbers = #tpu.dot_dimension_numbers<[1], [0], [0], [1], [0, 0, 1, 1], [], []>} : vector<8x32xf32>, vector<32x128xf32>, vector<8x128xf32> -> vector<8x128xf32>
    %358 = arith.addf %356, %357 : vector<8x128xf32>
    %359 = vector.extract_strided_slice %5 {offsets = [16, 128], sizes = [8, 128], strides = [1, 1]} : vector<64x256xf32> to vector<8x128xf32>
    %cst_60 = arith.constant dense<0.000000e+00> : vector<8x128xf32>
    %360 = tpu.matmul %349, %9, %cst_60 {dimension_numbers = #tpu.dot_dimension_numbers<[1], [0], [0], [1], [0, 0, 1, 1], [], []>} : vector<8x32xf32>, vector<32x128xf32>, vector<8x128xf32> -> vector<8x128xf32>
    %361 = arith.addf %359, %360 : vector<8x128xf32>
    %362 = vector.extract_strided_slice %358 {offsets = [0, 0], sizes = [8, 32], strides = [1, 1]} : vector<8x128xf32> to vector<8x32xf32>
    %363 = arith.negf %362 : vector<8x32xf32>
    %364 = math.exp %363 : vector<8x32xf32>
    %cst_61 = arith.constant 1.000000e+00 : f32
    %365 = vector.broadcast %cst_61 : f32 to vector<8x32xf32>
    %366 = arith.addf %365, %364 : vector<8x32xf32>
    %367 = arith.divf %365, %366 : vector<8x32xf32>
    %368 = vector.extract_strided_slice %358 {offsets = [0, 32], sizes = [8, 32], strides = [1, 1]} : vector<8x128xf32> to vector<8x32xf32>
    %369 = arith.negf %368 : vector<8x32xf32>
    %370 = math.exp %369 : vector<8x32xf32>
    %cst_62 = arith.constant 1.000000e+00 : f32
    %371 = vector.broadcast %cst_62 : f32 to vector<8x32xf32>
    %372 = arith.addf %371, %370 : vector<8x32xf32>
    %373 = arith.divf %371, %372 : vector<8x32xf32>
    %374 = vector.extract_strided_slice %358 {offsets = [0, 64], sizes = [8, 32], strides = [1, 1]} : vector<8x128xf32> to vector<8x32xf32>
    %375 = math.tanh %374 : vector<8x32xf32>
    %376 = vector.extract_strided_slice %358 {offsets = [0, 96], sizes = [8, 32], strides = [1, 1]} : vector<8x128xf32> to vector<8x32xf32>
    %377 = arith.negf %376 : vector<8x32xf32>
    %378 = math.exp %377 : vector<8x32xf32>
    %cst_63 = arith.constant 1.000000e+00 : f32
    %379 = vector.broadcast %cst_63 : f32 to vector<8x32xf32>
    %380 = arith.addf %379, %378 : vector<8x32xf32>
    %381 = arith.divf %379, %380 : vector<8x32xf32>
    %382 = vector.extract_strided_slice %361 {offsets = [0, 0], sizes = [8, 32], strides = [1, 1]} : vector<8x128xf32> to vector<8x32xf32>
    %383 = arith.negf %382 : vector<8x32xf32>
    %384 = math.exp %383 : vector<8x32xf32>
    %cst_64 = arith.constant 1.000000e+00 : f32
    %385 = vector.broadcast %cst_64 : f32 to vector<8x32xf32>
    %386 = arith.addf %385, %384 : vector<8x32xf32>
    %387 = arith.divf %385, %386 : vector<8x32xf32>
    %388 = vector.extract_strided_slice %361 {offsets = [0, 32], sizes = [8, 32], strides = [1, 1]} : vector<8x128xf32> to vector<8x32xf32>
    %389 = arith.negf %388 : vector<8x32xf32>
    %390 = math.exp %389 : vector<8x32xf32>
    %cst_65 = arith.constant 1.000000e+00 : f32
    %391 = vector.broadcast %cst_65 : f32 to vector<8x32xf32>
    %392 = arith.addf %391, %390 : vector<8x32xf32>
    %393 = arith.divf %391, %392 : vector<8x32xf32>
    %394 = vector.extract_strided_slice %361 {offsets = [0, 64], sizes = [8, 32], strides = [1, 1]} : vector<8x128xf32> to vector<8x32xf32>
    %395 = math.tanh %394 : vector<8x32xf32>
    %396 = vector.extract_strided_slice %361 {offsets = [0, 96], sizes = [8, 32], strides = [1, 1]} : vector<8x128xf32> to vector<8x32xf32>
    %397 = arith.negf %396 : vector<8x32xf32>
    %398 = math.exp %397 : vector<8x32xf32>
    %cst_66 = arith.constant 1.000000e+00 : f32
    %399 = vector.broadcast %cst_66 : f32 to vector<8x32xf32>
    %400 = arith.addf %399, %398 : vector<8x32xf32>
    %401 = arith.divf %399, %400 : vector<8x32xf32>
    %402 = vector.extract_strided_slice %6 {offsets = [40, 0], sizes = [8, 32], strides = [1, 1]} : vector<64x32xf32> to vector<8x32xf32>
    %403 = vector.extract_strided_slice %6 {offsets = [16, 0], sizes = [8, 32], strides = [1, 1]} : vector<64x32xf32> to vector<8x32xf32>
    %404 = arith.mulf %373, %339 : vector<8x32xf32>
    %405 = arith.mulf %367, %375 : vector<8x32xf32>
    %406 = arith.addf %404, %405 : vector<8x32xf32>
    %407 = arith.mulf %406, %402 : vector<8x32xf32>
    %408 = math.tanh %407 : vector<8x32xf32>
    %409 = arith.mulf %381, %408 : vector<8x32xf32>
    %410 = arith.mulf %409, %402 : vector<8x32xf32>
    %411 = arith.mulf %393, %346 : vector<8x32xf32>
    %412 = arith.mulf %387, %395 : vector<8x32xf32>
    %413 = arith.addf %411, %412 : vector<8x32xf32>
    %414 = arith.mulf %413, %403 : vector<8x32xf32>
    %415 = math.tanh %414 : vector<8x32xf32>
    %416 = arith.mulf %401, %415 : vector<8x32xf32>
    %417 = arith.mulf %416, %403 : vector<8x32xf32>
    %418 = vector.extract_strided_slice %7 {offsets = [40, 0], sizes = [8, 32], strides = [1, 1]} : vector<64x32xf32> to vector<8x32xf32>
    %419 = arith.addf %410, %418 : vector<8x32xf32>
    %420 = arith.maximumf %352, %419 : vector<8x32xf32>
    %421 = vector.extract_strided_slice %7 {offsets = [16, 0], sizes = [8, 32], strides = [1, 1]} : vector<64x32xf32> to vector<8x32xf32>
    %422 = arith.addf %417, %421 : vector<8x32xf32>
    %423 = arith.maximumf %355, %422 : vector<8x32xf32>
    %424 = vector.extract_strided_slice %5 {offsets = [48, 0], sizes = [8, 128], strides = [1, 1]} : vector<64x256xf32> to vector<8x128xf32>
    %cst_67 = arith.constant dense<0.000000e+00> : vector<8x128xf32>
    %425 = tpu.matmul %410, %8, %cst_67 {dimension_numbers = #tpu.dot_dimension_numbers<[1], [0], [0], [1], [0, 0, 1, 1], [], []>} : vector<8x32xf32>, vector<32x128xf32>, vector<8x128xf32> -> vector<8x128xf32>
    %426 = arith.addf %424, %425 : vector<8x128xf32>
    %427 = vector.extract_strided_slice %5 {offsets = [8, 128], sizes = [8, 128], strides = [1, 1]} : vector<64x256xf32> to vector<8x128xf32>
    %cst_68 = arith.constant dense<0.000000e+00> : vector<8x128xf32>
    %428 = tpu.matmul %417, %9, %cst_68 {dimension_numbers = #tpu.dot_dimension_numbers<[1], [0], [0], [1], [0, 0, 1, 1], [], []>} : vector<8x32xf32>, vector<32x128xf32>, vector<8x128xf32> -> vector<8x128xf32>
    %429 = arith.addf %427, %428 : vector<8x128xf32>
    %430 = vector.extract_strided_slice %426 {offsets = [0, 0], sizes = [8, 32], strides = [1, 1]} : vector<8x128xf32> to vector<8x32xf32>
    %431 = arith.negf %430 : vector<8x32xf32>
    %432 = math.exp %431 : vector<8x32xf32>
    %cst_69 = arith.constant 1.000000e+00 : f32
    %433 = vector.broadcast %cst_69 : f32 to vector<8x32xf32>
    %434 = arith.addf %433, %432 : vector<8x32xf32>
    %435 = arith.divf %433, %434 : vector<8x32xf32>
    %436 = vector.extract_strided_slice %426 {offsets = [0, 32], sizes = [8, 32], strides = [1, 1]} : vector<8x128xf32> to vector<8x32xf32>
    %437 = arith.negf %436 : vector<8x32xf32>
    %438 = math.exp %437 : vector<8x32xf32>
    %cst_70 = arith.constant 1.000000e+00 : f32
    %439 = vector.broadcast %cst_70 : f32 to vector<8x32xf32>
    %440 = arith.addf %439, %438 : vector<8x32xf32>
    %441 = arith.divf %439, %440 : vector<8x32xf32>
    %442 = vector.extract_strided_slice %426 {offsets = [0, 64], sizes = [8, 32], strides = [1, 1]} : vector<8x128xf32> to vector<8x32xf32>
    %443 = math.tanh %442 : vector<8x32xf32>
    %444 = vector.extract_strided_slice %426 {offsets = [0, 96], sizes = [8, 32], strides = [1, 1]} : vector<8x128xf32> to vector<8x32xf32>
    %445 = arith.negf %444 : vector<8x32xf32>
    %446 = math.exp %445 : vector<8x32xf32>
    %cst_71 = arith.constant 1.000000e+00 : f32
    %447 = vector.broadcast %cst_71 : f32 to vector<8x32xf32>
    %448 = arith.addf %447, %446 : vector<8x32xf32>
    %449 = arith.divf %447, %448 : vector<8x32xf32>
    %450 = vector.extract_strided_slice %429 {offsets = [0, 0], sizes = [8, 32], strides = [1, 1]} : vector<8x128xf32> to vector<8x32xf32>
    %451 = arith.negf %450 : vector<8x32xf32>
    %452 = math.exp %451 : vector<8x32xf32>
    %cst_72 = arith.constant 1.000000e+00 : f32
    %453 = vector.broadcast %cst_72 : f32 to vector<8x32xf32>
    %454 = arith.addf %453, %452 : vector<8x32xf32>
    %455 = arith.divf %453, %454 : vector<8x32xf32>
    %456 = vector.extract_strided_slice %429 {offsets = [0, 32], sizes = [8, 32], strides = [1, 1]} : vector<8x128xf32> to vector<8x32xf32>
    %457 = arith.negf %456 : vector<8x32xf32>
    %458 = math.exp %457 : vector<8x32xf32>
    %cst_73 = arith.constant 1.000000e+00 : f32
    %459 = vector.broadcast %cst_73 : f32 to vector<8x32xf32>
    %460 = arith.addf %459, %458 : vector<8x32xf32>
    %461 = arith.divf %459, %460 : vector<8x32xf32>
    %462 = vector.extract_strided_slice %429 {offsets = [0, 64], sizes = [8, 32], strides = [1, 1]} : vector<8x128xf32> to vector<8x32xf32>
    %463 = math.tanh %462 : vector<8x32xf32>
    %464 = vector.extract_strided_slice %429 {offsets = [0, 96], sizes = [8, 32], strides = [1, 1]} : vector<8x128xf32> to vector<8x32xf32>
    %465 = arith.negf %464 : vector<8x32xf32>
    %466 = math.exp %465 : vector<8x32xf32>
    %cst_74 = arith.constant 1.000000e+00 : f32
    %467 = vector.broadcast %cst_74 : f32 to vector<8x32xf32>
    %468 = arith.addf %467, %466 : vector<8x32xf32>
    %469 = arith.divf %467, %468 : vector<8x32xf32>
    %470 = vector.extract_strided_slice %6 {offsets = [48, 0], sizes = [8, 32], strides = [1, 1]} : vector<64x32xf32> to vector<8x32xf32>
    %471 = vector.extract_strided_slice %6 {offsets = [8, 0], sizes = [8, 32], strides = [1, 1]} : vector<64x32xf32> to vector<8x32xf32>
    %472 = arith.mulf %441, %407 : vector<8x32xf32>
    %473 = arith.mulf %435, %443 : vector<8x32xf32>
    %474 = arith.addf %472, %473 : vector<8x32xf32>
    %475 = arith.mulf %474, %470 : vector<8x32xf32>
    %476 = math.tanh %475 : vector<8x32xf32>
    %477 = arith.mulf %449, %476 : vector<8x32xf32>
    %478 = arith.mulf %477, %470 : vector<8x32xf32>
    %479 = arith.mulf %461, %414 : vector<8x32xf32>
    %480 = arith.mulf %455, %463 : vector<8x32xf32>
    %481 = arith.addf %479, %480 : vector<8x32xf32>
    %482 = arith.mulf %481, %471 : vector<8x32xf32>
    %483 = math.tanh %482 : vector<8x32xf32>
    %484 = arith.mulf %469, %483 : vector<8x32xf32>
    %485 = arith.mulf %484, %471 : vector<8x32xf32>
    %486 = vector.extract_strided_slice %7 {offsets = [48, 0], sizes = [8, 32], strides = [1, 1]} : vector<64x32xf32> to vector<8x32xf32>
    %487 = arith.addf %478, %486 : vector<8x32xf32>
    %488 = arith.maximumf %420, %487 : vector<8x32xf32>
    %489 = vector.extract_strided_slice %7 {offsets = [8, 0], sizes = [8, 32], strides = [1, 1]} : vector<64x32xf32> to vector<8x32xf32>
    %490 = arith.addf %485, %489 : vector<8x32xf32>
    %491 = arith.maximumf %423, %490 : vector<8x32xf32>
    %492 = vector.extract_strided_slice %5 {offsets = [56, 0], sizes = [8, 128], strides = [1, 1]} : vector<64x256xf32> to vector<8x128xf32>
    %cst_75 = arith.constant dense<0.000000e+00> : vector<8x128xf32>
    %493 = tpu.matmul %478, %8, %cst_75 {dimension_numbers = #tpu.dot_dimension_numbers<[1], [0], [0], [1], [0, 0, 1, 1], [], []>} : vector<8x32xf32>, vector<32x128xf32>, vector<8x128xf32> -> vector<8x128xf32>
    %494 = arith.addf %492, %493 : vector<8x128xf32>
    %495 = vector.extract_strided_slice %5 {offsets = [0, 128], sizes = [8, 128], strides = [1, 1]} : vector<64x256xf32> to vector<8x128xf32>
    %cst_76 = arith.constant dense<0.000000e+00> : vector<8x128xf32>
    %496 = tpu.matmul %485, %9, %cst_76 {dimension_numbers = #tpu.dot_dimension_numbers<[1], [0], [0], [1], [0, 0, 1, 1], [], []>} : vector<8x32xf32>, vector<32x128xf32>, vector<8x128xf32> -> vector<8x128xf32>
    %497 = arith.addf %495, %496 : vector<8x128xf32>
    %498 = vector.extract_strided_slice %494 {offsets = [0, 0], sizes = [8, 32], strides = [1, 1]} : vector<8x128xf32> to vector<8x32xf32>
    %499 = arith.negf %498 : vector<8x32xf32>
    %500 = math.exp %499 : vector<8x32xf32>
    %cst_77 = arith.constant 1.000000e+00 : f32
    %501 = vector.broadcast %cst_77 : f32 to vector<8x32xf32>
    %502 = arith.addf %501, %500 : vector<8x32xf32>
    %503 = arith.divf %501, %502 : vector<8x32xf32>
    %504 = vector.extract_strided_slice %494 {offsets = [0, 32], sizes = [8, 32], strides = [1, 1]} : vector<8x128xf32> to vector<8x32xf32>
    %505 = arith.negf %504 : vector<8x32xf32>
    %506 = math.exp %505 : vector<8x32xf32>
    %cst_78 = arith.constant 1.000000e+00 : f32
    %507 = vector.broadcast %cst_78 : f32 to vector<8x32xf32>
    %508 = arith.addf %507, %506 : vector<8x32xf32>
    %509 = arith.divf %507, %508 : vector<8x32xf32>
    %510 = vector.extract_strided_slice %494 {offsets = [0, 64], sizes = [8, 32], strides = [1, 1]} : vector<8x128xf32> to vector<8x32xf32>
    %511 = math.tanh %510 : vector<8x32xf32>
    %512 = vector.extract_strided_slice %494 {offsets = [0, 96], sizes = [8, 32], strides = [1, 1]} : vector<8x128xf32> to vector<8x32xf32>
    %513 = arith.negf %512 : vector<8x32xf32>
    %514 = math.exp %513 : vector<8x32xf32>
    %cst_79 = arith.constant 1.000000e+00 : f32
    %515 = vector.broadcast %cst_79 : f32 to vector<8x32xf32>
    %516 = arith.addf %515, %514 : vector<8x32xf32>
    %517 = arith.divf %515, %516 : vector<8x32xf32>
    %518 = vector.extract_strided_slice %497 {offsets = [0, 0], sizes = [8, 32], strides = [1, 1]} : vector<8x128xf32> to vector<8x32xf32>
    %519 = arith.negf %518 : vector<8x32xf32>
    %520 = math.exp %519 : vector<8x32xf32>
    %cst_80 = arith.constant 1.000000e+00 : f32
    %521 = vector.broadcast %cst_80 : f32 to vector<8x32xf32>
    %522 = arith.addf %521, %520 : vector<8x32xf32>
    %523 = arith.divf %521, %522 : vector<8x32xf32>
    %524 = vector.extract_strided_slice %497 {offsets = [0, 32], sizes = [8, 32], strides = [1, 1]} : vector<8x128xf32> to vector<8x32xf32>
    %525 = arith.negf %524 : vector<8x32xf32>
    %526 = math.exp %525 : vector<8x32xf32>
    %cst_81 = arith.constant 1.000000e+00 : f32
    %527 = vector.broadcast %cst_81 : f32 to vector<8x32xf32>
    %528 = arith.addf %527, %526 : vector<8x32xf32>
    %529 = arith.divf %527, %528 : vector<8x32xf32>
    %530 = vector.extract_strided_slice %497 {offsets = [0, 64], sizes = [8, 32], strides = [1, 1]} : vector<8x128xf32> to vector<8x32xf32>
    %531 = math.tanh %530 : vector<8x32xf32>
    %532 = vector.extract_strided_slice %497 {offsets = [0, 96], sizes = [8, 32], strides = [1, 1]} : vector<8x128xf32> to vector<8x32xf32>
    %533 = arith.negf %532 : vector<8x32xf32>
    %534 = math.exp %533 : vector<8x32xf32>
    %cst_82 = arith.constant 1.000000e+00 : f32
    %535 = vector.broadcast %cst_82 : f32 to vector<8x32xf32>
    %536 = arith.addf %535, %534 : vector<8x32xf32>
    %537 = arith.divf %535, %536 : vector<8x32xf32>
    %538 = vector.extract_strided_slice %6 {offsets = [56, 0], sizes = [8, 32], strides = [1, 1]} : vector<64x32xf32> to vector<8x32xf32>
    %539 = vector.extract_strided_slice %6 {offsets = [0, 0], sizes = [8, 32], strides = [1, 1]} : vector<64x32xf32> to vector<8x32xf32>
    %540 = arith.mulf %509, %475 : vector<8x32xf32>
    %541 = arith.mulf %503, %511 : vector<8x32xf32>
    %542 = arith.addf %540, %541 : vector<8x32xf32>
    %543 = arith.mulf %542, %538 : vector<8x32xf32>
    %544 = math.tanh %543 : vector<8x32xf32>
    %545 = arith.mulf %517, %544 : vector<8x32xf32>
    %546 = arith.mulf %545, %538 : vector<8x32xf32>
    %547 = arith.mulf %529, %482 : vector<8x32xf32>
    %548 = arith.mulf %523, %531 : vector<8x32xf32>
    %549 = arith.addf %547, %548 : vector<8x32xf32>
    %550 = arith.mulf %549, %539 : vector<8x32xf32>
    %551 = math.tanh %550 : vector<8x32xf32>
    %552 = arith.mulf %537, %551 : vector<8x32xf32>
    %553 = arith.mulf %552, %539 : vector<8x32xf32>
    %554 = vector.extract_strided_slice %7 {offsets = [56, 0], sizes = [8, 32], strides = [1, 1]} : vector<64x32xf32> to vector<8x32xf32>
    %555 = arith.addf %546, %554 : vector<8x32xf32>
    %556 = arith.maximumf %488, %555 : vector<8x32xf32>
    %557 = vector.extract_strided_slice %7 {offsets = [0, 0], sizes = [8, 32], strides = [1, 1]} : vector<64x32xf32> to vector<8x32xf32>
    %558 = arith.addf %553, %557 : vector<8x32xf32>
    %559 = arith.maximumf %491, %558 : vector<8x32xf32>
    %c0_83 = arith.constant 0 : index
    %c0_84 = arith.constant 0 : index
    %560 = vector.load %arg7[%c0_83, %c0_84] : memref<32x8xf32, #tpu.memory_space<vmem>>, vector<32x8xf32>
    %cst_85 = arith.constant dense<0.000000e+00> : vector<8x8xf32>
    %561 = tpu.matmul %556, %560, %cst_85 {dimension_numbers = #tpu.dot_dimension_numbers<[1], [0], [0], [1], [0, 0, 1, 1], [], []>} : vector<8x32xf32>, vector<32x8xf32>, vector<8x8xf32> -> vector<8x8xf32>
    %c0_86 = arith.constant 0 : index
    %c0_87 = arith.constant 0 : index
    %562 = vector.load %arg8[%c0_86, %c0_87] : memref<32x8xf32, #tpu.memory_space<vmem>>, vector<32x8xf32>
    %cst_88 = arith.constant dense<0.000000e+00> : vector<8x8xf32>
    %563 = tpu.matmul %559, %562, %cst_88 {dimension_numbers = #tpu.dot_dimension_numbers<[1], [0], [0], [1], [0, 0, 1, 1], [], []>} : vector<8x32xf32>, vector<32x8xf32>, vector<8x8xf32> -> vector<8x8xf32>
    %564 = arith.addf %561, %563 : vector<8x8xf32>
    %c0_89 = arith.constant 0 : index
    %c0_90 = arith.constant 0 : index
    %565 = vector.load %arg9[%c0_89, %c0_90] : memref<8x8xf32, #tpu.memory_space<vmem>>, vector<8x8xf32>
    tpu.vector_store %arg9[%c0_89, %c0_90], %564 {strides = array<i32>} : memref<8x8xf32, #tpu.memory_space<vmem>>, vector<8x8xf32>,
    return
  }
}

</mosaic_0001>

<llo_original>
// kernel: tpu_custom_call.1
$region0: #{tpu_custom_call.1}
  #allocation0 [shape = 'u32[]', space=smem, size = 0x4, offset = 0x4, fixed_abs, tag = 'smem constant byte address 0x4 - core index']
  #allocation1 [shape = 'u32[144,128]{1,0:T(1,128)}', space=vmem, size = 0x12000, scoped, tag = 'internal scratch']
  %s0 = inlined_call_operand.vmem [shape: f32[64,32], index: 0, kind: input, shape index: {}]
  %s1 = inlined_call_operand.vmem [shape: f32[64,32], index: 1, kind: input, shape index: {}]
  %s2 = inlined_call_operand.vmem [shape: f32[64,32], index: 2, kind: input, shape index: {}]
  %s3 = inlined_call_operand.vmem [shape: f32[32,256], index: 3, kind: input, shape index: {}]
  %s4 = inlined_call_operand.vmem [shape: f32[1,256], index: 4, kind: input, shape index: {}]
  %s5 = inlined_call_operand.vmem [shape: f32[32,128], index: 5, kind: input, shape index: {}]
  %s6 = inlined_call_operand.vmem [shape: f32[32,128], index: 6, kind: input, shape index: {}]
  %s7 = inlined_call_operand.vmem [shape: f32[32,8], index: 7, kind: input, shape index: {}]
  %s8 = inlined_call_operand.vmem [shape: f32[32,8], index: 8, kind: input, shape index: {}]
  %s9 = inlined_call_operand.hbm [shape: f32[8,8], index: 9, kind: output, shape index: {}]
  %s10 = sld [smem:[#allocation0]]
  $region46: #{tpu_custom_call.1} parent=0
    _
  %s12 = ssub.s32 1, %s10
  %s13 = scalar_select 0, %s12, %s10
  $region1: #{tpu_custom_call.1} parent=0
    #allocation2 [shape = 'u8[4096]{0}', space=vmem, size = 0x1000, scoped, tag = 'output window, operand 0, single buffered']
    #allocation3 [shape = 's32[1]{0}', space=sflag, size = 0x4, scoped, tag = 'scoped memory for tpu_custom_call.1']
    %14 = vsyncpa [#allocation3], 0
    // Predicated region
    $region2: #{tpu_custom_call.1} parent=1 // pred_check
      _
    $region3: #{tpu_custom_call.1} parent=1 // pred_check_branch
      %16 = sbr.rel (0) target = $region5
    $region4: #{tpu_custom_call.1} parent=1 // pred_region
      _
    $region5: #{tpu_custom_call.1} parent=1 // pred_fallthru
      _
    // Predicated region
    $region6: #{tpu_custom_call.1} parent=1 // pred_check
      _
    $region7: #{tpu_custom_call.1} parent=1 // pred_check_branch
      %18 = sbr.rel (0) target = $region9
    $region8: #{tpu_custom_call.1} parent=1 // pred_region
      _
    $region9: #{tpu_custom_call.1} parent=1 // pred_fallthru
      _
    // Predicated region
    $region10: #{tpu_custom_call.1} parent=1 // pred_check
      _
    $region11: #{tpu_custom_call.1} parent=1 // pred_check_branch
      %20 = sbr.rel (0) target = $region13
    $region12: #{tpu_custom_call.1} parent=1 // pred_region
      _
    $region13: #{tpu_custom_call.1} parent=1 // pred_fallthru
      _
    // Predicated region
    $region14: #{tpu_custom_call.1} parent=1 // pred_check
      _
    $region15: #{tpu_custom_call.1} parent=1 // pred_check_branch
      %22 = sbr.rel (0) target = $region17
    $region16: #{tpu_custom_call.1} parent=1 // pred_region
      _
    $region17: #{tpu_custom_call.1} parent=1 // pred_fallthru
      _
    // Predicated region
    $region18: #{tpu_custom_call.1} parent=1 // pred_check
      _
    $region19: #{tpu_custom_call.1} parent=1 // pred_check_branch
      %24 = sbr.rel (0) target = $region21
    $region20: #{tpu_custom_call.1} parent=1 // pred_region
      _
    $region21: #{tpu_custom_call.1} parent=1 // pred_fallthru
      _
    // Predicated region
    $region22: #{tpu_custom_call.1} parent=1 // pred_check
      _
    $region23: #{tpu_custom_call.1} parent=1 // pred_check_branch
      %26 = sbr.rel (0) target = $region25
    $region24: #{tpu_custom_call.1} parent=1 // pred_region
      _
    $region25: #{tpu_custom_call.1} parent=1 // pred_fallthru
      _
    // Predicated region
    $region26: #{tpu_custom_call.1} parent=1 // pred_check
      _
    $region27: #{tpu_custom_call.1} parent=1 // pred_check_branch
      %28 = sbr.rel (0) target = $region29
    $region28: #{tpu_custom_call.1} parent=1 // pred_region
      _
    $region29: #{tpu_custom_call.1} parent=1 // pred_fallthru
      _
    // Predicated region
    $region30: #{tpu_custom_call.1} parent=1 // pred_check
      _
    $region31: #{tpu_custom_call.1} parent=1 // pred_check_branch
      %30 = sbr.rel (0) target = $region33
    $region32: #{tpu_custom_call.1} parent=1 // pred_region
      _
    $region33: #{tpu_custom_call.1} parent=1 // pred_fallthru
      _
    // Predicated region
    $region34: #{tpu_custom_call.1} parent=1 // pred_check
      _
    $region35: #{tpu_custom_call.1} parent=1 // pred_check_branch
      %32 = sbr.rel (0) target = $region37
    $region36: #{tpu_custom_call.1} parent=1 // pred_region
      _
    $region37: #{tpu_custom_call.1} parent=1 // pred_fallthru
      _
    %v33 = vld [vmem:[%s0] sm:$0xff]
    %v34 = vld [vmem:[%s0 + $0x8] sm:$0xff]
    %v35 = vld [vmem:[%s0 + $0x10] sm:$0xff]
    %v36 = vld [vmem:[%s0 + $0x18] sm:$0xff]
    %v37 = vld [vmem:[%s0 + $0x20] sm:$0xff]
    %v38 = vld [vmem:[%s0 + $0x28] sm:$0xff]
    %v39 = vld [vmem:[%s0 + $0x30] sm:$0xff]
    %v40 = vld [vmem:[%s0 + $0x38] sm:$0xff]
    %v41 = vld [vmem:[%s3] sm:$0xff]
    %v42 = vld [vmem:[%s3 + $0x8] sm:$0xff]
    %v43 = vld [vmem:[%s3 + $0x10] sm:$0xff]
    %v44 = vld [vmem:[%s3 + $0x18] sm:$0xff]
    %v45 = vld [vmem:[%s3 + $0x20] sm:$0xff]
    %v46 = vld [vmem:[%s3 + $0x28] sm:$0xff]
    %v47 = vld [vmem:[%s3 + $0x30] sm:$0xff]
    %v48 = vld [vmem:[%s3 + $0x38] sm:$0xff]
    %v49 = vld [vmem:[%s4] sm:$0x3]
    %v51 = vlaneseq
    %v52 = vshrl.u32 %v51, 7
    %v53 = vsub.s32 0, %v52
    %v54 = vrot.slane %v49, %v53
    %v55 = vlaneseq
    %v56 = vshrl.u32 %v55, 7
    %v57 = vsub.s32 1, %v56
    %v58 = vrot.slane %v49, %v57
    %vm61 = vcmask 261120
    %v63 = vsel %vm61, %v33, 0
    %v66 = vsel %vm61, %v34, 0
    %v69 = vsel %vm61, %v35, 0
    %v72 = vsel %vm61, %v36, 0
    %v75 = vsel %vm61, %v37, 0
    %v78 = vsel %vm61, %v38, 0
    %v81 = vsel %vm61, %v39, 0
    %v84 = vsel %vm61, %v40, 0
    %86 = vmatprep.subr.mxu0 0.0
    %87 = vmatpush1.msra.mxu0 0.0
    %88 = vmatprep.subr.mxu0 0.0
    %89 = vmatpush1.msra.mxu0 0.0
    %90 = vmatprep.subr.mxu0 0.0
    %91 = vmatpush1.msra.mxu0 0.0
    %92 = vmatprep.subr.mxu0 0.0
    %93 = vmatpush1.msra.mxu0 0.0
    %94 = vmatprep.subr.mxu0 0.0
    %95 = vmatpush1.msra.mxu0 0.0
    %96 = vmatprep.subr.mxu0 0.0
    %97 = vmatpush1.msra.mxu0 0.0
    %98 = vmatprep.subr.mxu0 0.0
    %99 = vmatpush1.msra.mxu0 0.0
    %100 = vmatprep.subr.mxu0 0.0
    %101 = vmatpush1.msra.mxu0 0.0
    %102 = vmatprep.subr.mxu0 0.0
    %103 = vmatpush1.msra.mxu0 0.0
    %104 = vmatprep.subr.mxu0 0.0
    %105 = vmatpush1.msra.mxu0 0.0
    %106 = vmatprep.subr.mxu0 0.0
    %107 = vmatpush1.msra.mxu0 0.0
    %108 = vmatprep.subr.mxu0 0.0
    %109 = vmatpush1.msra.mxu0 0.0
    %110 = vmatprep.subr.mxu0 %v48
    %111 = vmatpush1.msra.mxu0 %v47
    %112 = vmatprep.subr.mxu0 %v46
    %113 = vmatpush1.msra.mxu0 %v45
    %114 = vmatprep.subr.mxu0 %v44
    %115 = vmatpush1.msra.mxu0 %v43
    %116 = vmatprep.subr.mxu0 %v42
    %117 = vmatpush1.msra.mxu0 %v41
    %118 = vmatprep.subr.mxu0 0.0
    %119 = vmatpush2.msra.mxu0 0.0
    %120 = vmatprep.subr.mxu0 0.0
    %121 = vmatpush2.msra.mxu0 0.0
    %122 = vmatprep.subr.mxu0 0.0
    %123 = vmatpush2.msra.mxu0 0.0
    %124 = vmatprep.subr.mxu0 0.0
    %125 = vmatpush2.msra.mxu0 0.0
    %126 = vmatprep.subr.mxu0 0.0
    %127 = vmatpush2.msra.mxu0 0.0
    %128 = vmatprep.subr.mxu0 0.0
    %129 = vmatpush2.msra.mxu0 0.0
    %130 = vmatprep.subr.mxu0 0.0
    %131 = vmatpush2.msra.mxu0 0.0
    %132 = vmatprep.subr.mxu0 0.0
    %133 = vmatpush2.msra.mxu0 0.0
    %134 = vmatprep.subr.mxu0 0.0
    %135 = vmatpush2.msra.mxu0 0.0
    %136 = vmatprep.subr.mxu0 0.0
    %137 = vmatpush2.msra.mxu0 0.0
    %138 = vmatprep.subr.mxu0 0.0
    %139 = vmatpush2.msra.mxu0 0.0
    %140 = vmatprep.subr.mxu0 0.0
    %141 = vmatpush2.msra.mxu0 0.0
    %142 = vmatprep.subr.mxu0 0.0
    %143 = vmatpush2.msra.mxu0 0.0
    %144 = vmatprep.subr.mxu0 0.0
    %145 = vmatpush2.msra.mxu0 0.0
    %146 = vmatprep.subr.mxu0 0.0
    %147 = vmatpush2.msra.mxu0 0.0
    %148 = vmatprep.subr.mxu0 0.0
    %149 = vmatpush2.msra.mxu0 0.0
    %150 = vmatprep.mubr.f32.mxu0 0.0
    %151 = vmatmul.mubr.f32.gmra.mxu0 %v63
    %v152 = vpop.f32.mrf.mxu0
    %v153 = vadd.f32 %v54, %v152
    %v154 = vpop.f32.mrf.mxu0
    %v155 = vadd.f32 %v58, %v154
    %156 = vmatprep.mubr.f32.mxu0 0.0
    %157 = vmatmul.mubr.f32.gmra.mxu0 %v66
    %v158 = vpop.f32.mrf.mxu0
    %v159 = vadd.f32 %v54, %v158
    %v160 = vpop.f32.mrf.mxu0
    %v161 = vadd.f32 %v58, %v160
    %162 = vmatprep.mubr.f32.mxu0 0.0
    %163 = vmatmul.mubr.f32.gmra.mxu0 %v69
    %v164 = vpop.f32.mrf.mxu0
    %v165 = vadd.f32 %v54, %v164
    %v166 = vpop.f32.mrf.mxu0
    %v167 = vadd.f32 %v58, %v166
    %168 = vmatprep.mubr.f32.mxu0 0.0
    %169 = vmatmul.mubr.f32.gmra.mxu0 %v72
    %v170 = vpop.f32.mrf.mxu0
    %v171 = vadd.f32 %v54, %v170
    %v172 = vpop.f32.mrf.mxu0
    %v173 = vadd.f32 %v58, %v172
    %174 = vmatprep.mubr.f32.mxu0 0.0
    %175 = vmatmul.mubr.f32.gmra.mxu0 %v75
    %v176 = vpop.f32.mrf.mxu0
    %v177 = vadd.f32 %v54, %v176
    %v178 = vpop.f32.mrf.mxu0
    %v179 = vadd.f32 %v58, %v178
    %180 = vmatprep.mubr.f32.mxu0 0.0
    %181 = vmatmul.mubr.f32.gmra.mxu0 %v78
    %v182 = vpop.f32.mrf.mxu0
    %v183 = vadd.f32 %v54, %v182
    %v184 = vpop.f32.mrf.mxu0
    %v185 = vadd.f32 %v58, %v184
    %186 = vmatprep.mubr.f32.mxu0 0.0
    %187 = vmatmul.mubr.f32.gmra.mxu0 %v81
    %v188 = vpop.f32.mrf.mxu0
    %v189 = vadd.f32 %v54, %v188
    %v190 = vpop.f32.mrf.mxu0
    %v191 = vadd.f32 %v58, %v190
    %192 = vmatprep.mubr.f32.mxu0 0.0
    %193 = vmatmul.mubr.f32.gmra.mxu0 %v84
    %v194 = vpop.f32.mrf.mxu0
    %v195 = vadd.f32 %v54, %v194
    %v196 = vpop.f32.mrf.mxu0
    %v197 = vadd.f32 %v58, %v196
    %198 = vdwg.mxu0
    %v199 = vld [vmem:[%s1] sm:$0xff]
    %v200 = vld [vmem:[%s1 + $0x8] sm:$0xff]
    %v201 = vld [vmem:[%s1 + $0x10] sm:$0xff]
    %v202 = vld [vmem:[%s1 + $0x18] sm:$0xff]
    %v203 = vld [vmem:[%s1 + $0x20] sm:$0xff]
    %v204 = vld [vmem:[%s1 + $0x28] sm:$0xff]
    %v205 = vld [vmem:[%s1 + $0x30] sm:$0xff]
    %v206 = vld [vmem:[%s1 + $0x38] sm:$0xff]
    %v207 = vld [vmem:[%s2] sm:$0xff]
    %v208 = vld [vmem:[%s2 + $0x8] sm:$0xff]
    %v209 = vld [vmem:[%s2 + $0x10] sm:$0xff]
    %v210 = vld [vmem:[%s2 + $0x18] sm:$0xff]
    %v211 = vld [vmem:[%s2 + $0x20] sm:$0xff]
    %v212 = vld [vmem:[%s2 + $0x28] sm:$0xff]
    %v213 = vld [vmem:[%s2 + $0x30] sm:$0xff]
    %v214 = vld [vmem:[%s2 + $0x38] sm:$0xff]
    %v215 = vld [vmem:[%s5] sm:$0xff]
    %v216 = vld [vmem:[%s5 + $0x8] sm:$0xff]
    %v217 = vld [vmem:[%s5 + $0x10] sm:$0xff]
    %v218 = vld [vmem:[%s5 + $0x18] sm:$0xff]
    %v219 = vld [vmem:[%s6] sm:$0xff]
    %v220 = vld [vmem:[%s6 + $0x8] sm:$0xff]
    %v221 = vld [vmem:[%s6 + $0x10] sm:$0xff]
    %v222 = vld [vmem:[%s6 + $0x18] sm:$0xff]
    %v224 = vsel %vm61, 0.0, 0
    %226 = vmatprep.subr.mxu0 0.0
    %227 = vmatpush1.msra.mxu0 0.0
    %228 = vmatprep.subr.mxu0 0.0
    %229 = vmatpush1.msra.mxu0 0.0
    %230 = vmatprep.subr.mxu0 0.0
    %231 = vmatpush1.msra.mxu0 0.0
    %232 = vmatprep.subr.mxu0 0.0
    %233 = vmatpush1.msra.mxu0 0.0
    %234 = vmatprep.subr.mxu0 0.0
    %235 = vmatpush1.msra.mxu0 0.0
    %236 = vmatprep.subr.mxu0 0.0
    %237 = vmatpush1.msra.mxu0 0.0
    %238 = vmatprep.subr.mxu0 0.0
    %239 = vmatpush1.msra.mxu0 0.0
    %240 = vmatprep.subr.mxu0 0.0
    %241 = vmatpush1.msra.mxu0 0.0
    %242 = vmatprep.subr.mxu0 0.0
    %243 = vmatpush1.msra.mxu0 0.0
    %244 = vmatprep.subr.mxu0 0.0
    %245 = vmatpush1.msra.mxu0 0.0
    %246 = vmatprep.subr.mxu0 0.0
    %247 = vmatpush1.msra.mxu0 0.0
    %248 = vmatprep.subr.mxu0 0.0
    %249 = vmatpush1.msra.mxu0 0.0
    %250 = vmatprep.subr.mxu0 0.0
    %251 = vmatpush1.msra.mxu0 %v218
    %252 = vmatprep.subr.mxu0 0.0
    %253 = vmatpush1.msra.mxu0 %v217
    %254 = vmatprep.subr.mxu0 0.0
    %255 = vmatpush1.msra.mxu0 %v216
    %256 = vmatprep.subr.mxu0 0.0
    %257 = vmatpush1.msra.mxu0 %v215
    %258 = vmatprep.subr.mxu0 0.0
    %259 = vmatpush2.msra.mxu0 0.0
    %260 = vmatprep.subr.mxu0 0.0
    %261 = vmatpush2.msra.mxu0 0.0
    %262 = vmatprep.subr.mxu0 0.0
    %263 = vmatpush2.msra.mxu0 0.0
    %264 = vmatprep.subr.mxu0 0.0
    %265 = vmatpush2.msra.mxu0 0.0
    %266 = vmatprep.subr.mxu0 0.0
    %267 = vmatpush2.msra.mxu0 0.0
    %268 = vmatprep.subr.mxu0 0.0
    %269 = vmatpush2.msra.mxu0 0.0
    %270 = vmatprep.subr.mxu0 0.0
    %271 = vmatpush2.msra.mxu0 0.0
    %272 = vmatprep.subr.mxu0 0.0
    %273 = vmatpush2.msra.mxu0 0.0
    %274 = vmatprep.subr.mxu0 0.0
    %275 = vmatpush2.msra.mxu0 0.0
    %276 = vmatprep.subr.mxu0 0.0
    %277 = vmatpush2.msra.mxu0 0.0
    %278 = vmatprep.subr.mxu0 0.0
    %279 = vmatpush2.msra.mxu0 0.0
    %280 = vmatprep.subr.mxu0 0.0
    %281 = vmatpush2.msra.mxu0 0.0
    %282 = vmatprep.subr.mxu0 0.0
    %283 = vmatpush2.msra.mxu0 0.0
    %284 = vmatprep.subr.mxu0 0.0
    %285 = vmatpush2.msra.mxu0 0.0
    %286 = vmatprep.subr.mxu0 0.0
    %287 = vmatpush2.msra.mxu0 0.0
    %288 = vmatprep.subr.mxu0 0.0
    %289 = vmatpush2.msra.mxu0 0.0
    %290 = vmatprep.mubr.f32.mxu0 0.0
    %291 = vmatmul.mubr.f32.gmra.mxu0 %v224
    %v292 = vpop.f32.mrf.mxu0
    %v293 = vadd.f32 0.0, %v292
    %v294 = vpop.f32.mrf.mxu0
    %295 = vdwg.mxu0
    %v296 = vadd.f32 %v153, %v293
    %297 = vmatprep.subr.mxu0 0.0
    %298 = vmatpush1.msra.mxu0 0.0
    %299 = vmatprep.subr.mxu0 0.0
    %300 = vmatpush1.msra.mxu0 0.0
    %301 = vmatprep.subr.mxu0 0.0
    %302 = vmatpush1.msra.mxu0 0.0
    %303 = vmatprep.subr.mxu0 0.0
    %304 = vmatpush1.msra.mxu0 0.0
    %305 = vmatprep.subr.mxu0 0.0
    %306 = vmatpush1.msra.mxu0 0.0
    %307 = vmatprep.subr.mxu0 0.0
    %308 = vmatpush1.msra.mxu0 0.0
    %309 = vmatprep.subr.mxu0 0.0
    %310 = vmatpush1.msra.mxu0 0.0
    %311 = vmatprep.subr.mxu0 0.0
    %312 = vmatpush1.msra.mxu0 0.0
    %313 = vmatprep.subr.mxu0 0.0
    %314 = vmatpush1.msra.mxu0 0.0
    %315 = vmatprep.subr.mxu0 0.0
    %316 = vmatpush1.msra.mxu0 0.0
    %317 = vmatprep.subr.mxu0 0.0
    %318 = vmatpush1.msra.mxu0 0.0
    %319 = vmatprep.subr.mxu0 0.0
    %320 = vmatpush1.msra.mxu0 0.0
    %321 = vmatprep.subr.mxu0 0.0
    %322 = vmatpush1.msra.mxu0 %v222
    %323 = vmatprep.subr.mxu0 0.0
    %324 = vmatpush1.msra.mxu0 %v221
    %325 = vmatprep.subr.mxu0 0.0
    %326 = vmatpush1.msra.mxu0 %v220
    %327 = vmatprep.subr.mxu0 0.0
    %328 = vmatpush1.msra.mxu0 %v219
    %329 = vmatprep.subr.mxu0 0.0
    %330 = vmatpush2.msra.mxu0 0.0
    %331 = vmatprep.subr.mxu0 0.0
    %332 = vmatpush2.msra.mxu0 0.0
    %333 = vmatprep.subr.mxu0 0.0
    %334 = vmatpush2.msra.mxu0 0.0
    %335 = vmatprep.subr.mxu0 0.0
    %336 = vmatpush2.msra.mxu0 0.0
    %337 = vmatprep.subr.mxu0 0.0
    %338 = vmatpush2.msra.mxu0 0.0
    %339 = vmatprep.subr.mxu0 0.0
    %340 = vmatpush2.msra.mxu0 0.0
    %341 = vmatprep.subr.mxu0 0.0
    %342 = vmatpush2.msra.mxu0 0.0
    %343 = vmatprep.subr.mxu0 0.0
    %344 = vmatpush2.msra.mxu0 0.0
    %345 = vmatprep.subr.mxu0 0.0
    %346 = vmatpush2.msra.mxu0 0.0
    %347 = vmatprep.subr.mxu0 0.0
    %348 = vmatpush2.msra.mxu0 0.0
    %349 = vmatprep.subr.mxu0 0.0
    %350 = vmatpush2.msra.mxu0 0.0
    %351 = vmatprep.subr.mxu0 0.0
    %352 = vmatpush2.msra.mxu0 0.0
    %353 = vmatprep.subr.mxu0 0.0
    %354 = vmatpush2.msra.mxu0 0.0
    %355 = vmatprep.subr.mxu0 0.0
    %356 = vmatpush2.msra.mxu0 0.0
    %357 = vmatprep.subr.mxu0 0.0
    %358 = vmatpush2.msra.mxu0 0.0
    %359 = vmatprep.subr.mxu0 0.0
    %360 = vmatpush2.msra.mxu0 0.0
    %361 = vmatprep.mubr.f32.mxu0 0.0
    %362 = vmatmul.mubr.f32.gmra.mxu0 %v224
    %v363 = vpop.f32.mrf.mxu0
    %v364 = vadd.f32 0.0, %v363
    %v365 = vpop.f32.mrf.mxu0
    %366 = vdwg.mxu0
    %v367 = vadd.f32 %v197, %v364
    %v368 = vxor.u32 %v296, 2147483648
    %v369 = vmul.f32 %v368, 1.442695
    %v370 = vpow.pop %v369
    %v371 = vadd.f32 %v370, 1.0
    %v372 = vrcp.pop %v371
    %v373 = vmul.f32 1.0, %v372
    %v374 = vtanh.pop %v296
    %v375 = vxor.u32 %v367, 2147483648
    %v376 = vmul.f32 %v375, 1.442695
    %v377 = vpow.pop %v376
    %v378 = vadd.f32 %v377, 1.0
    %v379 = vrcp.pop %v378
    %v380 = vmul.f32 1.0, %v379
    %v381 = vtanh.pop %v367
    %v382 = vmul.f32 %v373, 0.0
    %384 = vrot.lane.b32.xlu0 %v374, 64
    %v385 = vpop.permute.xlu0 %384
    %v387 = vmul.f32 %v373, %v385
    %389 = vrot.lane.b32.xlu0 %v387, 32
    %v390 = vpop.permute.xlu0 %389
    %v392 = vadd.f32 %v382, %v390
    %394 = vrot.lane.b32.xlu0 %v199, 32
    %v395 = vpop.permute.xlu0 %394
    %v397 = vmul.f32 %v392, %v395
    %v398 = vtanh.pop %v397
    %400 = vrot.lane.b32.xlu0 %v398, 64
    %v401 = vpop.permute.xlu0 %400
    %v403 = vmul.f32 %v373, %v401
    %404 = vrot.lane.b32.xlu0 %v199, 96
    %v405 = vpop.permute.xlu0 %404
    %v407 = vmul.f32 %v403, %v405
    %v408 = vmul.f32 %v380, 0.0
    %410 = vrot.lane.b32.xlu0 %v381, 64
    %v411 = vpop.permute.xlu0 %410
    %v413 = vmul.f32 %v380, %v411
    %415 = vrot.lane.b32.xlu0 %v413, 32
    %v416 = vpop.permute.xlu0 %415
    %v418 = vadd.f32 %v408, %v416
    %420 = vrot.lane.b32.xlu0 %v206, 32
    %v421 = vpop.permute.xlu0 %420
    %v423 = vmul.f32 %v418, %v421
    %v424 = vtanh.pop %v423
    %426 = vrot.lane.b32.xlu0 %v424, 64
    %v427 = vpop.permute.xlu0 %426
    %v429 = vmul.f32 %v380, %v427
    %430 = vrot.lane.b32.xlu0 %v206, 96
    %v431 = vpop.permute.xlu0 %430
    %v433 = vmul.f32 %v429, %v431
    %435 = vrot.lane.b32.xlu0 %v207, 96
    %v436 = vpop.permute.xlu0 %435
    %v438 = vadd.f32 %v407, %v436
    %v439 = vmax.f32 %v438, -1000000.0
    %441 = vrot.lane.b32.xlu0 %v214, 96
    %v442 = vpop.permute.xlu0 %441
    %v444 = vadd.f32 %v433, %v442
    %v445 = vmax.f32 %v444, -1000000.0
    %447 = vrot.lane.b32.xlu0 %v407, 32
    %v448 = vpop.permute.xlu0 %447
    %v449 = vsel %vm61, %v448, 0
    %451 = vmatprep.subr.mxu0 0.0
    %452 = vmatpush1.msra.mxu0 0.0
    %453 = vmatprep.subr.mxu0 0.0
    %454 = vmatpush1.msra.mxu0 0.0
    %455 = vmatprep.subr.mxu0 0.0
    %456 = vmatpush1.msra.mxu0 0.0
    %457 = vmatprep.subr.mxu0 0.0
    %458 = vmatpush1.msra.mxu0 0.0
    %459 = vmatprep.subr.mxu0 0.0
    %460 = vmatpush1.msra.mxu0 0.0
    %461 = vmatprep.subr.mxu0 0.0
    %462 = vmatpush1.msra.mxu0 0.0
    %463 = vmatprep.subr.mxu0 0.0
    %464 = vmatpush1.msra.mxu0 0.0
    %465 = vmatprep.subr.mxu0 0.0
    %466 = vmatpush1.msra.mxu0 0.0
    %467 = vmatprep.subr.mxu0 0.0
    %468 = vmatpush1.msra.mxu0 0.0
    %469 = vmatprep.subr.mxu0 0.0
    %470 = vmatpush1.msra.mxu0 0.0
    %471 = vmatprep.subr.mxu0 0.0
    %472 = vmatpush1.msra.mxu0 0.0
    %473 = vmatprep.subr.mxu0 0.0
    %474 = vmatpush1.msra.mxu0 0.0
    %475 = vmatprep.subr.mxu0 0.0
    %476 = vmatpush1.msra.mxu0 %v218
    %477 = vmatprep.subr.mxu0 0.0
    %478 = vmatpush1.msra.mxu0 %v217
    %479 = vmatprep.subr.mxu0 0.0
    %480 = vmatpush1.msra.mxu0 %v216
    %481 = vmatprep.subr.mxu0 0.0
    %482 = vmatpush1.msra.mxu0 %v215
    %483 = vmatprep.subr.mxu0 0.0
    %484 = vmatpush2.msra.mxu0 0.0
    %485 = vmatprep.subr.mxu0 0.0
    %486 = vmatpush2.msra.mxu0 0.0
    %487 = vmatprep.subr.mxu0 0.0
    %488 = vmatpush2.msra.mxu0 0.0
    %489 = vmatprep.subr.mxu0 0.0
    %490 = vmatpush2.msra.mxu0 0.0
    %491 = vmatprep.subr.mxu0 0.0
    %492 = vmatpush2.msra.mxu0 0.0
    %493 = vmatprep.subr.mxu0 0.0
    %494 = vmatpush2.msra.mxu0 0.0
    %495 = vmatprep.subr.mxu0 0.0
    %496 = vmatpush2.msra.mxu0 0.0
    %497 = vmatprep.subr.mxu0 0.0
    %498 = vmatpush2.msra.mxu0 0.0
    %499 = vmatprep.subr.mxu0 0.0
    %500 = vmatpush2.msra.mxu0 0.0
    %501 = vmatprep.subr.mxu0 0.0
    %502 = vmatpush2.msra.mxu0 0.0
    %503 = vmatprep.subr.mxu0 0.0
    %504 = vmatpush2.msra.mxu0 0.0
    %505 = vmatprep.subr.mxu0 0.0
    %506 = vmatpush2.msra.mxu0 0.0
    %507 = vmatprep.subr.mxu0 0.0
    %508 = vmatpush2.msra.mxu0 0.0
    %509 = vmatprep.subr.mxu0 0.0
    %510 = vmatpush2.msra.mxu0 0.0
    %511 = vmatprep.subr.mxu0 0.0
    %512 = vmatpush2.msra.mxu0 0.0
    %513 = vmatprep.subr.mxu0 0.0
    %514 = vmatpush2.msra.mxu0 0.0
    %515 = vmatprep.mubr.f32.mxu0 0.0
    %516 = vmatmul.mubr.f32.gmra.mxu0 %v449
    %v517 = vpop.f32.mrf.mxu0
    %v518 = vadd.f32 0.0, %v517
    %v519 = vpop.f32.mrf.mxu0
    %520 = vdwg.mxu0
    %v521 = vadd.f32 %v159, %v518
    %523 = vrot.lane.b32.xlu0 %v433, 32
    %v524 = vpop.permute.xlu0 %523
    %v525 = vsel %vm61, %v524, 0
    %527 = vmatprep.subr.mxu0 0.0
    %528 = vmatpush1.msra.mxu0 0.0
    %529 = vmatprep.subr.mxu0 0.0
    %530 = vmatpush1.msra.mxu0 0.0
    %531 = vmatprep.subr.mxu0 0.0
    %532 = vmatpush1.msra.mxu0 0.0
    %533 = vmatprep.subr.mxu0 0.0
    %534 = vmatpush1.msra.mxu0 0.0
    %535 = vmatprep.subr.mxu0 0.0
    %536 = vmatpush1.msra.mxu0 0.0
    %537 = vmatprep.subr.mxu0 0.0
    %538 = vmatpush1.msra.mxu0 0.0
    %539 = vmatprep.subr.mxu0 0.0
    %540 = vmatpush1.msra.mxu0 0.0
    %541 = vmatprep.subr.mxu0 0.0
    %542 = vmatpush1.msra.mxu0 0.0
    %543 = vmatprep.subr.mxu0 0.0
    %544 = vmatpush1.msra.mxu0 0.0
    %545 = vmatprep.subr.mxu0 0.0
    %546 = vmatpush1.msra.mxu0 0.0
    %547 = vmatprep.subr.mxu0 0.0
    %548 = vmatpush1.msra.mxu0 0.0
    %549 = vmatprep.subr.mxu0 0.0
    %550 = vmatpush1.msra.mxu0 0.0
    %551 = vmatprep.subr.mxu0 0.0
    %552 = vmatpush1.msra.mxu0 %v222
    %553 = vmatprep.subr.mxu0 0.0
    %554 = vmatpush1.msra.mxu0 %v221
    %555 = vmatprep.subr.mxu0 0.0
    %556 = vmatpush1.msra.mxu0 %v220
    %557 = vmatprep.subr.mxu0 0.0
    %558 = vmatpush1.msra.mxu0 %v219
    %559 = vmatprep.subr.mxu0 0.0
    %560 = vmatpush2.msra.mxu0 0.0
    %561 = vmatprep.subr.mxu0 0.0
    %562 = vmatpush2.msra.mxu0 0.0
    %563 = vmatprep.subr.mxu0 0.0
    %564 = vmatpush2.msra.mxu0 0.0
    %565 = vmatprep.subr.mxu0 0.0
    %566 = vmatpush2.msra.mxu0 0.0
    %567 = vmatprep.subr.mxu0 0.0
    %568 = vmatpush2.msra.mxu0 0.0
    %569 = vmatprep.subr.mxu0 0.0
    %570 = vmatpush2.msra.mxu0 0.0
    %571 = vmatprep.subr.mxu0 0.0
    %572 = vmatpush2.msra.mxu0 0.0
    %573 = vmatprep.subr.mxu0 0.0
    %574 = vmatpush2.msra.mxu0 0.0
    %575 = vmatprep.subr.mxu0 0.0
    %576 = vmatpush2.msra.mxu0 0.0
    %577 = vmatprep.subr.mxu0 0.0
    %578 = vmatpush2.msra.mxu0 0.0
    %579 = vmatprep.subr.mxu0 0.0
    %580 = vmatpush2.msra.mxu0 0.0
    %581 = vmatprep.subr.mxu0 0.0
    %582 = vmatpush2.msra.mxu0 0.0
    %583 = vmatprep.subr.mxu0 0.0
    %584 = vmatpush2.msra.mxu0 0.0
    %585 = vmatprep.subr.mxu0 0.0
    %586 = vmatpush2.msra.mxu0 0.0
    %587 = vmatprep.subr.mxu0 0.0
    %588 = vmatpush2.msra.mxu0 0.0
    %589 = vmatprep.subr.mxu0 0.0
    %590 = vmatpush2.msra.mxu0 0.0
    %591 = vmatprep.mubr.f32.mxu0 0.0
    %592 = vmatmul.mubr.f32.gmra.mxu0 %v525
    %v593 = vpop.f32.mrf.mxu0
    %v594 = vadd.f32 0.0, %v593
    %v595 = vpop.f32.mrf.mxu0
    %596 = vdwg.mxu0
    %v597 = vadd.f32 %v191, %v594
    %v598 = vxor.u32 %v521, 2147483648
    %v599 = vmul.f32 %v598, 1.442695
    %v600 = vpow.pop %v599
    %v601 = vadd.f32 %v600, 1.0
    %v602 = vrcp.pop %v601
    %v603 = vmul.f32 1.0, %v602
    %v604 = vtanh.pop %v521
    %v605 = vxor.u32 %v597, 2147483648
    %v606 = vmul.f32 %v605, 1.442695
    %v607 = vpow.pop %v606
    %v608 = vadd.f32 %v607, 1.0
    %v609 = vrcp.pop %v608
    %v610 = vmul.f32 1.0, %v609
    %v611 = vtanh.pop %v597
    %v612 = vmul.f32 %v603, %v397
    %614 = vrot.lane.b32.xlu0 %v604, 64
    %v615 = vpop.permute.xlu0 %614
    %v617 = vmul.f32 %v603, %v615
    %619 = vrot.lane.b32.xlu0 %v617, 32
    %v620 = vpop.permute.xlu0 %619
    %v622 = vadd.f32 %v612, %v620
    %624 = vrot.lane.b32.xlu0 %v200, 32
    %v625 = vpop.permute.xlu0 %624
    %v627 = vmul.f32 %v622, %v625
    %v628 = vtanh.pop %v627
    %630 = vrot.lane.b32.xlu0 %v628, 64
    %v631 = vpop.permute.xlu0 %630
    %v633 = vmul.f32 %v603, %v631
    %634 = vrot.lane.b32.xlu0 %v200, 96
    %v635 = vpop.permute.xlu0 %634
    %v637 = vmul.f32 %v633, %v635
    %v638 = vmul.f32 %v610, %v423
    %640 = vrot.lane.b32.xlu0 %v611, 64
    %v641 = vpop.permute.xlu0 %640
    %v643 = vmul.f32 %v610, %v641
    %645 = vrot.lane.b32.xlu0 %v643, 32
    %v646 = vpop.permute.xlu0 %645
    %v648 = vadd.f32 %v638, %v646
    %650 = vrot.lane.b32.xlu0 %v205, 32
    %v651 = vpop.permute.xlu0 %650
    %v653 = vmul.f32 %v648, %v651
    %v654 = vtanh.pop %v653
    %656 = vrot.lane.b32.xlu0 %v654, 64
    %v657 = vpop.permute.xlu0 %656
    %v659 = vmul.f32 %v610, %v657
    %660 = vrot.lane.b32.xlu0 %v205, 96
    %v661 = vpop.permute.xlu0 %660
    %v663 = vmul.f32 %v659, %v661
    %665 = vrot.lane.b32.xlu0 %v208, 96
    %v666 = vpop.permute.xlu0 %665
    %v668 = vadd.f32 %v637, %v666
    %v669 = vmax.f32 %v439, %v668
    %671 = vrot.lane.b32.xlu0 %v213, 96
    %v672 = vpop.permute.xlu0 %671
    %v674 = vadd.f32 %v663, %v672
    %v675 = vmax.f32 %v445, %v674
    %677 = vrot.lane.b32.xlu0 %v637, 32
    %v678 = vpop.permute.xlu0 %677
    %v679 = vsel %vm61, %v678, 0
    %681 = vmatprep.subr.mxu0 0.0
    %682 = vmatpush1.msra.mxu0 0.0
    %683 = vmatprep.subr.mxu0 0.0
    %684 = vmatpush1.msra.mxu0 0.0
    %685 = vmatprep.subr.mxu0 0.0
    %686 = vmatpush1.msra.mxu0 0.0
    %687 = vmatprep.subr.mxu0 0.0
    %688 = vmatpush1.msra.mxu0 0.0
    %689 = vmatprep.subr.mxu0 0.0
    %690 = vmatpush1.msra.mxu0 0.0
    %691 = vmatprep.subr.mxu0 0.0
    %692 = vmatpush1.msra.mxu0 0.0
    %693 = vmatprep.subr.mxu0 0.0
    %694 = vmatpush1.msra.mxu0 0.0
    %695 = vmatprep.subr.mxu0 0.0
    %696 = vmatpush1.msra.mxu0 0.0
    %697 = vmatprep.subr.mxu0 0.0
    %698 = vmatpush1.msra.mxu0 0.0
    %699 = vmatprep.subr.mxu0 0.0
    %700 = vmatpush1.msra.mxu0 0.0
    %701 = vmatprep.subr.mxu0 0.0
    %702 = vmatpush1.msra.mxu0 0.0
    %703 = vmatprep.subr.mxu0 0.0
    %704 = vmatpush1.msra.mxu0 0.0
    %705 = vmatprep.subr.mxu0 0.0
    %706 = vmatpush1.msra.mxu0 %v218
    %707 = vmatprep.subr.mxu0 0.0
    %708 = vmatpush1.msra.mxu0 %v217
    %709 = vmatprep.subr.mxu0 0.0
    %710 = vmatpush1.msra.mxu0 %v216
    %711 = vmatprep.subr.mxu0 0.0
    %712 = vmatpush1.msra.mxu0 %v215
    %713 = vmatprep.subr.mxu0 0.0
    %714 = vmatpush2.msra.mxu0 0.0
    %715 = vmatprep.subr.mxu0 0.0
    %716 = vmatpush2.msra.mxu0 0.0
    %717 = vmatprep.subr.mxu0 0.0
    %718 = vmatpush2.msra.mxu0 0.0
    %719 = vmatprep.subr.mxu0 0.0
    %720 = vmatpush2.msra.mxu0 0.0
    %721 = vmatprep.subr.mxu0 0.0
    %722 = vmatpush2.msra.mxu0 0.0
    %723 = vmatprep.subr.mxu0 0.0
    %724 = vmatpush2.msra.mxu0 0.0
    %725 = vmatprep.subr.mxu0 0.0
    %726 = vmatpush2.msra.mxu0 0.0
    %727 = vmatprep.subr.mxu0 0.0
    %728 = vmatpush2.msra.mxu0 0.0
    %729 = vmatprep.subr.mxu0 0.0
    %730 = vmatpush2.msra.mxu0 0.0
    %731 = vmatprep.subr.mxu0 0.0
    %732 = vmatpush2.msra.mxu0 0.0
    %733 = vmatprep.subr.mxu0 0.0
    %734 = vmatpush2.msra.mxu0 0.0
    %735 = vmatprep.subr.mxu0 0.0
    %736 = vmatpush2.msra.mxu0 0.0
    %737 = vmatprep.subr.mxu0 0.0
    %738 = vmatpush2.msra.mxu0 0.0
    %739 = vmatprep.subr.mxu0 0.0
    %740 = vmatpush2.msra.mxu0 0.0
    %741 = vmatprep.subr.mxu0 0.0
    %742 = vmatpush2.msra.mxu0 0.0
    %743 = vmatprep.subr.mxu0 0.0
    %744 = vmatpush2.msra.mxu0 0.0
    %745 = vmatprep.mubr.f32.mxu0 0.0
    %746 = vmatmul.mubr.f32.gmra.mxu0 %v679
    %v747 = vpop.f32.mrf.mxu0
    %v748 = vadd.f32 0.0, %v747
    %v749 = vpop.f32.mrf.mxu0
    %750 = vdwg.mxu0
    %v751 = vadd.f32 %v165, %v748
    %753 = vrot.lane.b32.xlu0 %v663, 32
    %v754 = vpop.permute.xlu0 %753
    %v755 = vsel %vm61, %v754, 0
    %757 = vmatprep.subr.mxu0 0.0
    %758 = vmatpush1.msra.mxu0 0.0
    %759 = vmatprep.subr.mxu0 0.0
    %760 = vmatpush1.msra.mxu0 0.0
    %761 = vmatprep.subr.mxu0 0.0
    %762 = vmatpush1.msra.mxu0 0.0
    %763 = vmatprep.subr.mxu0 0.0
    %764 = vmatpush1.msra.mxu0 0.0
    %765 = vmatprep.subr.mxu0 0.0
    %766 = vmatpush1.msra.mxu0 0.0
    %767 = vmatprep.subr.mxu0 0.0
    %768 = vmatpush1.msra.mxu0 0.0
    %769 = vmatprep.subr.mxu0 0.0
    %770 = vmatpush1.msra.mxu0 0.0
    %771 = vmatprep.subr.mxu0 0.0
    %772 = vmatpush1.msra.mxu0 0.0
    %773 = vmatprep.subr.mxu0 0.0
    %774 = vmatpush1.msra.mxu0 0.0
    %775 = vmatprep.subr.mxu0 0.0
    %776 = vmatpush1.msra.mxu0 0.0
    %777 = vmatprep.subr.mxu0 0.0
    %778 = vmatpush1.msra.mxu0 0.0
    %779 = vmatprep.subr.mxu0 0.0
    %780 = vmatpush1.msra.mxu0 0.0
    %781 = vmatprep.subr.mxu0 0.0
    %782 = vmatpush1.msra.mxu0 %v222
    %783 = vmatprep.subr.mxu0 0.0
    %784 = vmatpush1.msra.mxu0 %v221
    %785 = vmatprep.subr.mxu0 0.0
    %786 = vmatpush1.msra.mxu0 %v220
    %787 = vmatprep.subr.mxu0 0.0
    %788 = vmatpush1.msra.mxu0 %v219
    %789 = vmatprep.subr.mxu0 0.0
    %790 = vmatpush2.msra.mxu0 0.0
    %791 = vmatprep.subr.mxu0 0.0
    %792 = vmatpush2.msra.mxu0 0.0
    %793 = vmatprep.subr.mxu0 0.0
    %794 = vmatpush2.msra.mxu0 0.0
    %795 = vmatprep.subr.mxu0 0.0
    %796 = vmatpush2.msra.mxu0 0.0
    %797 = vmatprep.subr.mxu0 0.0
    %798 = vmatpush2.msra.mxu0 0.0
    %799 = vmatprep.subr.mxu0 0.0
    %800 = vmatpush2.msra.mxu0 0.0
    %801 = vmatprep.subr.mxu0 0.0
    %802 = vmatpush2.msra.mxu0 0.0
    %803 = vmatprep.subr.mxu0 0.0
    %804 = vmatpush2.msra.mxu0 0.0
    %805 = vmatprep.subr.mxu0 0.0
    %806 = vmatpush2.msra.mxu0 0.0
    %807 = vmatprep.subr.mxu0 0.0
    %808 = vmatpush2.msra.mxu0 0.0
    %809 = vmatprep.subr.mxu0 0.0
    %810 = vmatpush2.msra.mxu0 0.0
    %811 = vmatprep.subr.mxu0 0.0
    %812 = vmatpush2.msra.mxu0 0.0
    %813 = vmatprep.subr.mxu0 0.0
    %814 = vmatpush2.msra.mxu0 0.0
    %815 = vmatprep.subr.mxu0 0.0
    %816 = vmatpush2.msra.mxu0 0.0
    %817 = vmatprep.subr.mxu0 0.0
    %818 = vmatpush2.msra.mxu0 0.0
    %819 = vmatprep.subr.mxu0 0.0
    %820 = vmatpush2.msra.mxu0 0.0
    %821 = vmatprep.mubr.f32.mxu0 0.0
    %822 = vmatmul.mubr.f32.gmra.mxu0 %v755
    %v823 = vpop.f32.mrf.mxu0
    %v824 = vadd.f32 0.0, %v823
    %v825 = vpop.f32.mrf.mxu0
    %826 = vdwg.mxu0
    %v827 = vadd.f32 %v185, %v824
    %v828 = vxor.u32 %v751, 2147483648
    %v829 = vmul.f32 %v828, 1.442695
    %v830 = vpow.pop %v829
    %v831 = vadd.f32 %v830, 1.0
    %v832 = vrcp.pop %v831
    %v833 = vmul.f32 1.0, %v832
    %v834 = vtanh.pop %v751
    %v835 = vxor.u32 %v827, 2147483648
    %v836 = vmul.f32 %v835, 1.442695
    %v837 = vpow.pop %v836
    %v838 = vadd.f32 %v837, 1.0
    %v839 = vrcp.pop %v838
    %v840 = vmul.f32 1.0, %v839
    %v841 = vtanh.pop %v827
    %v842 = vmul.f32 %v833, %v627
    %844 = vrot.lane.b32.xlu0 %v834, 64
    %v845 = vpop.permute.xlu0 %844
    %v847 = vmul.f32 %v833, %v845
    %849 = vrot.lane.b32.xlu0 %v847, 32
    %v850 = vpop.permute.xlu0 %849
    %v852 = vadd.f32 %v842, %v850
    %854 = vrot.lane.b32.xlu0 %v201, 32
    %v855 = vpop.permute.xlu0 %854
    %v857 = vmul.f32 %v852, %v855
    %v858 = vtanh.pop %v857
    %860 = vrot.lane.b32.xlu0 %v858, 64
    %v861 = vpop.permute.xlu0 %860
    %v863 = vmul.f32 %v833, %v861
    %864 = vrot.lane.b32.xlu0 %v201, 96
    %v865 = vpop.permute.xlu0 %864
    %v867 = vmul.f32 %v863, %v865
    %v868 = vmul.f32 %v840, %v653
    %870 = vrot.lane.b32.xlu0 %v841, 64
    %v871 = vpop.permute.xlu0 %870
    %v873 = vmul.f32 %v840, %v871
    %875 = vrot.lane.b32.xlu0 %v873, 32
    %v876 = vpop.permute.xlu0 %875
    %v878 = vadd.f32 %v868, %v876
    %880 = vrot.lane.b32.xlu0 %v204, 32
    %v881 = vpop.permute.xlu0 %880
    %v883 = vmul.f32 %v878, %v881
    %v884 = vtanh.pop %v883
    %886 = vrot.lane.b32.xlu0 %v884, 64
    %v887 = vpop.permute.xlu0 %886
    %v889 = vmul.f32 %v840, %v887
    %890 = vrot.lane.b32.xlu0 %v204, 96
    %v891 = vpop.permute.xlu0 %890
    %v893 = vmul.f32 %v889, %v891
    %895 = vrot.lane.b32.xlu0 %v209, 96
    %v896 = vpop.permute.xlu0 %895
    %v898 = vadd.f32 %v867, %v896
    %v899 = vmax.f32 %v669, %v898
    %901 = vrot.lane.b32.xlu0 %v212, 96
    %v902 = vpop.permute.xlu0 %901
    %v904 = vadd.f32 %v893, %v902
    %v905 = vmax.f32 %v675, %v904
    %907 = vrot.lane.b32.xlu0 %v867, 32
    %v908 = vpop.permute.xlu0 %907
    %v909 = vsel %vm61, %v908, 0
    %911 = vmatprep.subr.mxu0 0.0
    %912 = vmatpush1.msra.mxu0 0.0
    %913 = vmatprep.subr.mxu0 0.0
    %914 = vmatpush1.msra.mxu0 0.0
    %915 = vmatprep.subr.mxu0 0.0
    %916 = vmatpush1.msra.mxu0 0.0
    %917 = vmatprep.subr.mxu0 0.0
    %918 = vmatpush1.msra.mxu0 0.0
    %919 = vmatprep.subr.mxu0 0.0
    %920 = vmatpush1.msra.mxu0 0.0
    %921 = vmatprep.subr.mxu0 0.0
    %922 = vmatpush1.msra.mxu0 0.0
    %923 = vmatprep.subr.mxu0 0.0
    %924 = vmatpush1.msra.mxu0 0.0
    %925 = vmatprep.subr.mxu0 0.0
    %926 = vmatpush1.msra.mxu0 0.0
    %927 = vmatprep.subr.mxu0 0.0
    %928 = vmatpush1.msra.mxu0 0.0
    %929 = vmatprep.subr.mxu0 0.0
    %930 = vmatpush1.msra.mxu0 0.0
    %931 = vmatprep.subr.mxu0 0.0
    %932 = vmatpush1.msra.mxu0 0.0
    %933 = vmatprep.subr.mxu0 0.0
    %934 = vmatpush1.msra.mxu0 0.0
    %935 = vmatprep.subr.mxu0 0.0
    %936 = vmatpush1.msra.mxu0 %v218
    %937 = vmatprep.subr.mxu0 0.0
    %938 = vmatpush1.msra.mxu0 %v217
    %939 = vmatprep.subr.mxu0 0.0
    %940 = vmatpush1.msra.mxu0 %v216
    %941 = vmatprep.subr.mxu0 0.0
    %942 = vmatpush1.msra.mxu0 %v215
    %943 = vmatprep.subr.mxu0 0.0
    %944 = vmatpush2.msra.mxu0 0.0
    %945 = vmatprep.subr.mxu0 0.0
    %946 = vmatpush2.msra.mxu0 0.0
    %947 = vmatprep.subr.mxu0 0.0
    %948 = vmatpush2.msra.mxu0 0.0
    %949 = vmatprep.subr.mxu0 0.0
    %950 = vmatpush2.msra.mxu0 0.0
    %951 = vmatprep.subr.mxu0 0.0
    %952 = vmatpush2.msra.mxu0 0.0
    %953 = vmatprep.subr.mxu0 0.0
    %954 = vmatpush2.msra.mxu0 0.0
    %955 = vmatprep.subr.mxu0 0.0
    %956 = vmatpush2.msra.mxu0 0.0
    %957 = vmatprep.subr.mxu0 0.0
    %958 = vmatpush2.msra.mxu0 0.0
    %959 = vmatprep.subr.mxu0 0.0
    %960 = vmatpush2.msra.mxu0 0.0
    %961 = vmatprep.subr.mxu0 0.0
    %962 = vmatpush2.msra.mxu0 0.0
    %963 = vmatprep.subr.mxu0 0.0
    %964 = vmatpush2.msra.mxu0 0.0
    %965 = vmatprep.subr.mxu0 0.0
    %966 = vmatpush2.msra.mxu0 0.0
    %967 = vmatprep.subr.mxu0 0.0
    %968 = vmatpush2.msra.mxu0 0.0
    %969 = vmatprep.subr.mxu0 0.0
    %970 = vmatpush2.msra.mxu0 0.0
    %971 = vmatprep.subr.mxu0 0.0
    %972 = vmatpush2.msra.mxu0 0.0
    %973 = vmatprep.subr.mxu0 0.0
    %974 = vmatpush2.msra.mxu0 0.0
    %975 = vmatprep.mubr.f32.mxu0 0.0
    %976 = vmatmul.mubr.f32.gmra.mxu0 %v909
    %v977 = vpop.f32.mrf.mxu0
    %v978 = vadd.f32 0.0, %v977
    %v979 = vpop.f32.mrf.mxu0
    %980 = vdwg.mxu0
    %v981 = vadd.f32 %v171, %v978
    %983 = vrot.lane.b32.xlu0 %v893, 32
    %v984 = vpop.permute.xlu0 %983
    %v985 = vsel %vm61, %v984, 0
    %987 = vmatprep.subr.mxu0 0.0
    %988 = vmatpush1.msra.mxu0 0.0
    %989 = vmatprep.subr.mxu0 0.0
    %990 = vmatpush1.msra.mxu0 0.0
    %991 = vmatprep.subr.mxu0 0.0
    %992 = vmatpush1.msra.mxu0 0.0
    %993 = vmatprep.subr.mxu0 0.0
    %994 = vmatpush1.msra.mxu0 0.0
    %995 = vmatprep.subr.mxu0 0.0
    %996 = vmatpush1.msra.mxu0 0.0
    %997 = vmatprep.subr.mxu0 0.0
    %998 = vmatpush1.msra.mxu0 0.0
    %999 = vmatprep.subr.mxu0 0.0
    %1000 = vmatpush1.msra.mxu0 0.0
    %1001 = vmatprep.subr.mxu0 0.0
    %1002 = vmatpush1.msra.mxu0 0.0
    %1003 = vmatprep.subr.mxu0 0.0
    %1004 = vmatpush1.msra.mxu0 0.0
    %1005 = vmatprep.subr.mxu0 0.0
    %1006 = vmatpush1.msra.mxu0 0.0
    %1007 = vmatprep.subr.mxu0 0.0
    %1008 = vmatpush1.msra.mxu0 0.0
    %1009 = vmatprep.subr.mxu0 0.0
    %1010 = vmatpush1.msra.mxu0 0.0
    %1011 = vmatprep.subr.mxu0 0.0
    %1012 = vmatpush1.msra.mxu0 %v222
    %1013 = vmatprep.subr.mxu0 0.0
    %1014 = vmatpush1.msra.mxu0 %v221
    %1015 = vmatprep.subr.mxu0 0.0
    %1016 = vmatpush1.msra.mxu0 %v220
    %1017 = vmatprep.subr.mxu0 0.0
    %1018 = vmatpush1.msra.mxu0 %v219
    %1019 = vmatprep.subr.mxu0 0.0
    %1020 = vmatpush2.msra.mxu0 0.0
    %1021 = vmatprep.subr.mxu0 0.0
    %1022 = vmatpush2.msra.mxu0 0.0
    %1023 = vmatprep.subr.mxu0 0.0
    %1024 = vmatpush2.msra.mxu0 0.0
    %1025 = vmatprep.subr.mxu0 0.0
    %1026 = vmatpush2.msra.mxu0 0.0
    %1027 = vmatprep.subr.mxu0 0.0
    %1028 = vmatpush2.msra.mxu0 0.0
    %1029 = vmatprep.subr.mxu0 0.0
    %1030 = vmatpush2.msra.mxu0 0.0
    %1031 = vmatprep.subr.mxu0 0.0
    %1032 = vmatpush2.msra.mxu0 0.0
    %1033 = vmatprep.subr.mxu0 0.0
    %1034 = vmatpush2.msra.mxu0 0.0
    %1035 = vmatprep.subr.mxu0 0.0
    %1036 = vmatpush2.msra.mxu0 0.0
    %1037 = vmatprep.subr.mxu0 0.0
    %1038 = vmatpush2.msra.mxu0 0.0
    %1039 = vmatprep.subr.mxu0 0.0
    %1040 = vmatpush2.msra.mxu0 0.0
    %1041 = vmatprep.subr.mxu0 0.0
    %1042 = vmatpush2.msra.mxu0 0.0
    %1043 = vmatprep.subr.mxu0 0.0
    %1044 = vmatpush2.msra.mxu0 0.0
    %1045 = vmatprep.subr.mxu0 0.0
    %1046 = vmatpush2.msra.mxu0 0.0
    %1047 = vmatprep.subr.mxu0 0.0
    %1048 = vmatpush2.msra.mxu0 0.0
    %1049 = vmatprep.subr.mxu0 0.0
    %1050 = vmatpush2.msra.mxu0 0.0
    %1051 = vmatprep.mubr.f32.mxu0 0.0
    %1052 = vmatmul.mubr.f32.gmra.mxu0 %v985
    %v1053 = vpop.f32.mrf.mxu0
    %v1054 = vadd.f32 0.0, %v1053
    %v1055 = vpop.f32.mrf.mxu0
    %1056 = vdwg.mxu0
    %v1057 = vadd.f32 %v179, %v1054
    %v1058 = vxor.u32 %v981, 2147483648
    %v1059 = vmul.f32 %v1058, 1.442695
    %v1060 = vpow.pop %v1059
    %v1061 = vadd.f32 %v1060, 1.0
    %v1062 = vrcp.pop %v1061
    %v1063 = vmul.f32 1.0, %v1062
    %v1064 = vtanh.pop %v981
    %v1065 = vxor.u32 %v1057, 2147483648
    %v1066 = vmul.f32 %v1065, 1.442695
    %v1067 = vpow.pop %v1066
    %v1068 = vadd.f32 %v1067, 1.0
    %v1069 = vrcp.pop %v1068
    %v1070 = vmul.f32 1.0, %v1069
    %v1071 = vtanh.pop %v1057
    %v1072 = vmul.f32 %v1063, %v857
    %1074 = vrot.lane.b32.xlu0 %v1064, 64
    %v1075 = vpop.permute.xlu0 %1074
    %v1077 = vmul.f32 %v1063, %v1075
    %1079 = vrot.lane.b32.xlu0 %v1077, 32
    %v1080 = vpop.permute.xlu0 %1079
    %v1082 = vadd.f32 %v1072, %v1080
    %1084 = vrot.lane.b32.xlu0 %v202, 32
    %v1085 = vpop.permute.xlu0 %1084
    %v1087 = vmul.f32 %v1082, %v1085
    %v1088 = vtanh.pop %v1087
    %1090 = vrot.lane.b32.xlu0 %v1088, 64
    %v1091 = vpop.permute.xlu0 %1090
    %v1093 = vmul.f32 %v1063, %v1091
    %1094 = vrot.lane.b32.xlu0 %v202, 96
    %v1095 = vpop.permute.xlu0 %1094
    %v1097 = vmul.f32 %v1093, %v1095
    %v1098 = vmul.f32 %v1070, %v883
    %1100 = vrot.lane.b32.xlu0 %v1071, 64
    %v1101 = vpop.permute.xlu0 %1100
    %v1103 = vmul.f32 %v1070, %v1101
    %1105 = vrot.lane.b32.xlu0 %v1103, 32
    %v1106 = vpop.permute.xlu0 %1105
    %v1108 = vadd.f32 %v1098, %v1106
    %1110 = vrot.lane.b32.xlu0 %v203, 32
    %v1111 = vpop.permute.xlu0 %1110
    %v1113 = vmul.f32 %v1108, %v1111
    %v1114 = vtanh.pop %v1113
    %1116 = vrot.lane.b32.xlu0 %v1114, 64
    %v1117 = vpop.permute.xlu0 %1116
    %v1119 = vmul.f32 %v1070, %v1117
    %1120 = vrot.lane.b32.xlu0 %v203, 96
    %v1121 = vpop.permute.xlu0 %1120
    %v1123 = vmul.f32 %v1119, %v1121
    %1125 = vrot.lane.b32.xlu0 %v210, 96
    %v1126 = vpop.permute.xlu0 %1125
    %v1128 = vadd.f32 %v1097, %v1126
    %v1129 = vmax.f32 %v899, %v1128
    %1131 = vrot.lane.b32.xlu0 %v211, 96
    %v1132 = vpop.permute.xlu0 %1131
    %v1134 = vadd.f32 %v1123, %v1132
    %v1135 = vmax.f32 %v905, %v1134
    %1137 = vrot.lane.b32.xlu0 %v1097, 32
    %v1138 = vpop.permute.xlu0 %1137
    %v1139 = vsel %vm61, %v1138, 0
    %1141 = vmatprep.subr.mxu0 0.0
    %1142 = vmatpush1.msra.mxu0 0.0
    %1143 = vmatprep.subr.mxu0 0.0
    %1144 = vmatpush1.msra.mxu0 0.0
    %1145 = vmatprep.subr.mxu0 0.0
    %1146 = vmatpush1.msra.mxu0 0.0
    %1147 = vmatprep.subr.mxu0 0.0
    %1148 = vmatpush1.msra.mxu0 0.0
    %1149 = vmatprep.subr.mxu0 0.0
    %1150 = vmatpush1.msra.mxu0 0.0
    %1151 = vmatprep.subr.mxu0 0.0
    %1152 = vmatpush1.msra.mxu0 0.0
    %1153 = vmatprep.subr.mxu0 0.0
    %1154 = vmatpush1.msra.mxu0 0.0
    %1155 = vmatprep.subr.mxu0 0.0
    %1156 = vmatpush1.msra.mxu0 0.0
    %1157 = vmatprep.subr.mxu0 0.0
    %1158 = vmatpush1.msra.mxu0 0.0
    %1159 = vmatprep.subr.mxu0 0.0
    %1160 = vmatpush1.msra.mxu0 0.0
    %1161 = vmatprep.subr.mxu0 0.0
    %1162 = vmatpush1.msra.mxu0 0.0
    %1163 = vmatprep.subr.mxu0 0.0
    %1164 = vmatpush1.msra.mxu0 0.0
    %1165 = vmatprep.subr.mxu0 0.0
    %1166 = vmatpush1.msra.mxu0 %v218
    %1167 = vmatprep.subr.mxu0 0.0
    %1168 = vmatpush1.msra.mxu0 %v217
    %1169 = vmatprep.subr.mxu0 0.0
    %1170 = vmatpush1.msra.mxu0 %v216
    %1171 = vmatprep.subr.mxu0 0.0
    %1172 = vmatpush1.msra.mxu0 %v215
    %1173 = vmatprep.subr.mxu0 0.0
    %1174 = vmatpush2.msra.mxu0 0.0
    %1175 = vmatprep.subr.mxu0 0.0
    %1176 = vmatpush2.msra.mxu0 0.0
    %1177 = vmatprep.subr.mxu0 0.0
    %1178 = vmatpush2.msra.mxu0 0.0
    %1179 = vmatprep.subr.mxu0 0.0
    %1180 = vmatpush2.msra.mxu0 0.0
    %1181 = vmatprep.subr.mxu0 0.0
    %1182 = vmatpush2.msra.mxu0 0.0
    %1183 = vmatprep.subr.mxu0 0.0
    %1184 = vmatpush2.msra.mxu0 0.0
    %1185 = vmatprep.subr.mxu0 0.0
    %1186 = vmatpush2.msra.mxu0 0.0
    %1187 = vmatprep.subr.mxu0 0.0
    %1188 = vmatpush2.msra.mxu0 0.0
    %1189 = vmatprep.subr.mxu0 0.0
    %1190 = vmatpush2.msra.mxu0 0.0
    %1191 = vmatprep.subr.mxu0 0.0
    %1192 = vmatpush2.msra.mxu0 0.0
    %1193 = vmatprep.subr.mxu0 0.0
    %1194 = vmatpush2.msra.mxu0 0.0
    %1195 = vmatprep.subr.mxu0 0.0
    %1196 = vmatpush2.msra.mxu0 0.0
    %1197 = vmatprep.subr.mxu0 0.0
    %1198 = vmatpush2.msra.mxu0 0.0
    %1199 = vmatprep.subr.mxu0 0.0
    %1200 = vmatpush2.msra.mxu0 0.0
    %1201 = vmatprep.subr.mxu0 0.0
    %1202 = vmatpush2.msra.mxu0 0.0
    %1203 = vmatprep.subr.mxu0 0.0
    %1204 = vmatpush2.msra.mxu0 0.0
    %1205 = vmatprep.mubr.f32.mxu0 0.0
    %1206 = vmatmul.mubr.f32.gmra.mxu0 %v1139
    %v1207 = vpop.f32.mrf.mxu0
    %v1208 = vadd.f32 0.0, %v1207
    %v1209 = vpop.f32.mrf.mxu0
    %1210 = vdwg.mxu0
    %v1211 = vadd.f32 %v177, %v1208
    %1213 = vrot.lane.b32.xlu0 %v1123, 32
    %v1214 = vpop.permute.xlu0 %1213
    %v1215 = vsel %vm61, %v1214, 0
    %1217 = vmatprep.subr.mxu0 0.0
    %1218 = vmatpush1.msra.mxu0 0.0
    %1219 = vmatprep.subr.mxu0 0.0
    %1220 = vmatpush1.msra.mxu0 0.0
    %1221 = vmatprep.subr.mxu0 0.0
    %1222 = vmatpush1.msra.mxu0 0.0
    %1223 = vmatprep.subr.mxu0 0.0
    %1224 = vmatpush1.msra.mxu0 0.0
    %1225 = vmatprep.subr.mxu0 0.0
    %1226 = vmatpush1.msra.mxu0 0.0
    %1227 = vmatprep.subr.mxu0 0.0
    %1228 = vmatpush1.msra.mxu0 0.0
    %1229 = vmatprep.subr.mxu0 0.0
    %1230 = vmatpush1.msra.mxu0 0.0
    %1231 = vmatprep.subr.mxu0 0.0
    %1232 = vmatpush1.msra.mxu0 0.0
    %1233 = vmatprep.subr.mxu0 0.0
    %1234 = vmatpush1.msra.mxu0 0.0
    %1235 = vmatprep.subr.mxu0 0.0
    %1236 = vmatpush1.msra.mxu0 0.0
    %1237 = vmatprep.subr.mxu0 0.0
    %1238 = vmatpush1.msra.mxu0 0.0
    %1239 = vmatprep.subr.mxu0 0.0
    %1240 = vmatpush1.msra.mxu0 0.0
    %1241 = vmatprep.subr.mxu0 0.0
    %1242 = vmatpush1.msra.mxu0 %v222
    %1243 = vmatprep.subr.mxu0 0.0
    %1244 = vmatpush1.msra.mxu0 %v221
    %1245 = vmatprep.subr.mxu0 0.0
    %1246 = vmatpush1.msra.mxu0 %v220
    %1247 = vmatprep.subr.mxu0 0.0
    %1248 = vmatpush1.msra.mxu0 %v219
    %1249 = vmatprep.subr.mxu0 0.0
    %1250 = vmatpush2.msra.mxu0 0.0
    %1251 = vmatprep.subr.mxu0 0.0
    %1252 = vmatpush2.msra.mxu0 0.0
    %1253 = vmatprep.subr.mxu0 0.0
    %1254 = vmatpush2.msra.mxu0 0.0
    %1255 = vmatprep.subr.mxu0 0.0
    %1256 = vmatpush2.msra.mxu0 0.0
    %1257 = vmatprep.subr.mxu0 0.0
    %1258 = vmatpush2.msra.mxu0 0.0
    %1259 = vmatprep.subr.mxu0 0.0
    %1260 = vmatpush2.msra.mxu0 0.0
    %1261 = vmatprep.subr.mxu0 0.0
    %1262 = vmatpush2.msra.mxu0 0.0
    %1263 = vmatprep.subr.mxu0 0.0
    %1264 = vmatpush2.msra.mxu0 0.0
    %1265 = vmatprep.subr.mxu0 0.0
    %1266 = vmatpush2.msra.mxu0 0.0
    %1267 = vmatprep.subr.mxu0 0.0
    %1268 = vmatpush2.msra.mxu0 0.0
    %1269 = vmatprep.subr.mxu0 0.0
    %1270 = vmatpush2.msra.mxu0 0.0
    %1271 = vmatprep.subr.mxu0 0.0
    %1272 = vmatpush2.msra.mxu0 0.0
    %1273 = vmatprep.subr.mxu0 0.0
    %1274 = vmatpush2.msra.mxu0 0.0
    %1275 = vmatprep.subr.mxu0 0.0
    %1276 = vmatpush2.msra.mxu0 0.0
    %1277 = vmatprep.subr.mxu0 0.0
    %1278 = vmatpush2.msra.mxu0 0.0
    %1279 = vmatprep.subr.mxu0 0.0
    %1280 = vmatpush2.msra.mxu0 0.0
    %1281 = vmatprep.mubr.f32.mxu0 0.0
    %1282 = vmatmul.mubr.f32.gmra.mxu0 %v1215
    %v1283 = vpop.f32.mrf.mxu0
    %v1284 = vadd.f32 0.0, %v1283
    %v1285 = vpop.f32.mrf.mxu0
    %1286 = vdwg.mxu0
    %v1287 = vadd.f32 %v173, %v1284
    %v1288 = vxor.u32 %v1211, 2147483648
    %v1289 = vmul.f32 %v1288, 1.442695
    %v1290 = vpow.pop %v1289
    %v1291 = vadd.f32 %v1290, 1.0
    %v1292 = vrcp.pop %v1291
    %v1293 = vmul.f32 1.0, %v1292
    %v1294 = vtanh.pop %v1211
    %v1295 = vxor.u32 %v1287, 2147483648
    %v1296 = vmul.f32 %v1295, 1.442695
    %v1297 = vpow.pop %v1296
    %v1298 = vadd.f32 %v1297, 1.0
    %v1299 = vrcp.pop %v1298
    %v1300 = vmul.f32 1.0, %v1299
    %v1301 = vtanh.pop %v1287
    %v1302 = vmul.f32 %v1293, %v1087
    %1304 = vrot.lane.b32.xlu0 %v1294, 64
    %v1305 = vpop.permute.xlu0 %1304
    %v1307 = vmul.f32 %v1293, %v1305
    %1309 = vrot.lane.b32.xlu0 %v1307, 32
    %v1310 = vpop.permute.xlu0 %1309
    %v1312 = vadd.f32 %v1302, %v1310
    %v1313 = vmul.f32 %v1312, %v1111
    %v1314 = vtanh.pop %v1313
    %1316 = vrot.lane.b32.xlu0 %v1314, 64
    %v1317 = vpop.permute.xlu0 %1316
    %v1319 = vmul.f32 %v1293, %v1317
    %v1320 = vmul.f32 %v1319, %v1121
    %v1321 = vmul.f32 %v1300, %v1113
    %1323 = vrot.lane.b32.xlu0 %v1301, 64
    %v1324 = vpop.permute.xlu0 %1323
    %v1326 = vmul.f32 %v1300, %v1324
    %1328 = vrot.lane.b32.xlu0 %v1326, 32
    %v1329 = vpop.permute.xlu0 %1328
    %v1331 = vadd.f32 %v1321, %v1329
    %v1332 = vmul.f32 %v1331, %v1085
    %v1333 = vtanh.pop %v1332
    %1335 = vrot.lane.b32.xlu0 %v1333, 64
    %v1336 = vpop.permute.xlu0 %1335
    %v1338 = vmul.f32 %v1300, %v1336
    %v1339 = vmul.f32 %v1338, %v1095
    %v1340 = vadd.f32 %v1320, %v1132
    %v1341 = vmax.f32 %v1129, %v1340
    %v1342 = vadd.f32 %v1339, %v1126
    %v1343 = vmax.f32 %v1135, %v1342
    %1345 = vrot.lane.b32.xlu0 %v1320, 32
    %v1346 = vpop.permute.xlu0 %1345
    %v1347 = vsel %vm61, %v1346, 0
    %1349 = vmatprep.subr.mxu0 0.0
    %1350 = vmatpush1.msra.mxu0 0.0
    %1351 = vmatprep.subr.mxu0 0.0
    %1352 = vmatpush1.msra.mxu0 0.0
    %1353 = vmatprep.subr.mxu0 0.0
    %1354 = vmatpush1.msra.mxu0 0.0
    %1355 = vmatprep.subr.mxu0 0.0
    %1356 = vmatpush1.msra.mxu0 0.0
    %1357 = vmatprep.subr.mxu0 0.0
    %1358 = vmatpush1.msra.mxu0 0.0
    %1359 = vmatprep.subr.mxu0 0.0
    %1360 = vmatpush1.msra.mxu0 0.0
    %1361 = vmatprep.subr.mxu0 0.0
    %1362 = vmatpush1.msra.mxu0 0.0
    %1363 = vmatprep.subr.mxu0 0.0
    %1364 = vmatpush1.msra.mxu0 0.0
    %1365 = vmatprep.subr.mxu0 0.0
    %1366 = vmatpush1.msra.mxu0 0.0
    %1367 = vmatprep.subr.mxu0 0.0
    %1368 = vmatpush1.msra.mxu0 0.0
    %1369 = vmatprep.subr.mxu0 0.0
    %1370 = vmatpush1.msra.mxu0 0.0
    %1371 = vmatprep.subr.mxu0 0.0
    %1372 = vmatpush1.msra.mxu0 0.0
    %1373 = vmatprep.subr.mxu0 0.0
    %1374 = vmatpush1.msra.mxu0 %v218
    %1375 = vmatprep.subr.mxu0 0.0
    %1376 = vmatpush1.msra.mxu0 %v217
    %1377 = vmatprep.subr.mxu0 0.0
    %1378 = vmatpush1.msra.mxu0 %v216
    %1379 = vmatprep.subr.mxu0 0.0
    %1380 = vmatpush1.msra.mxu0 %v215
    %1381 = vmatprep.subr.mxu0 0.0
    %1382 = vmatpush2.msra.mxu0 0.0
    %1383 = vmatprep.subr.mxu0 0.0
    %1384 = vmatpush2.msra.mxu0 0.0
    %1385 = vmatprep.subr.mxu0 0.0
    %1386 = vmatpush2.msra.mxu0 0.0
    %1387 = vmatprep.subr.mxu0 0.0
    %1388 = vmatpush2.msra.mxu0 0.0
    %1389 = vmatprep.subr.mxu0 0.0
    %1390 = vmatpush2.msra.mxu0 0.0
    %1391 = vmatprep.subr.mxu0 0.0
    %1392 = vmatpush2.msra.mxu0 0.0
    %1393 = vmatprep.subr.mxu0 0.0
    %1394 = vmatpush2.msra.mxu0 0.0
    %1395 = vmatprep.subr.mxu0 0.0
    %1396 = vmatpush2.msra.mxu0 0.0
    %1397 = vmatprep.subr.mxu0 0.0
    %1398 = vmatpush2.msra.mxu0 0.0
    %1399 = vmatprep.subr.mxu0 0.0
    %1400 = vmatpush2.msra.mxu0 0.0
    %1401 = vmatprep.subr.mxu0 0.0
    %1402 = vmatpush2.msra.mxu0 0.0
    %1403 = vmatprep.subr.mxu0 0.0
    %1404 = vmatpush2.msra.mxu0 0.0
    %1405 = vmatprep.subr.mxu0 0.0
    %1406 = vmatpush2.msra.mxu0 0.0
    %1407 = vmatprep.subr.mxu0 0.0
    %1408 = vmatpush2.msra.mxu0 0.0
    %1409 = vmatprep.subr.mxu0 0.0
    %1410 = vmatpush2.msra.mxu0 0.0
    %1411 = vmatprep.subr.mxu0 0.0
    %1412 = vmatpush2.msra.mxu0 0.0
    %1413 = vmatprep.mubr.f32.mxu0 0.0
    %1414 = vmatmul.mubr.f32.gmra.mxu0 %v1347
    %v1415 = vpop.f32.mrf.mxu0
    %v1416 = vadd.f32 0.0, %v1415
    %v1417 = vpop.f32.mrf.mxu0
    %1418 = vdwg.mxu0
    %v1419 = vadd.f32 %v183, %v1416
    %1421 = vrot.lane.b32.xlu0 %v1339, 32
    %v1422 = vpop.permute.xlu0 %1421
    %v1423 = vsel %vm61, %v1422, 0
    %1425 = vmatprep.subr.mxu0 0.0
    %1426 = vmatpush1.msra.mxu0 0.0
    %1427 = vmatprep.subr.mxu0 0.0
    %1428 = vmatpush1.msra.mxu0 0.0
    %1429 = vmatprep.subr.mxu0 0.0
    %1430 = vmatpush1.msra.mxu0 0.0
    %1431 = vmatprep.subr.mxu0 0.0
    %1432 = vmatpush1.msra.mxu0 0.0
    %1433 = vmatprep.subr.mxu0 0.0
    %1434 = vmatpush1.msra.mxu0 0.0
    %1435 = vmatprep.subr.mxu0 0.0
    %1436 = vmatpush1.msra.mxu0 0.0
    %1437 = vmatprep.subr.mxu0 0.0
    %1438 = vmatpush1.msra.mxu0 0.0
    %1439 = vmatprep.subr.mxu0 0.0
    %1440 = vmatpush1.msra.mxu0 0.0
    %1441 = vmatprep.subr.mxu0 0.0
    %1442 = vmatpush1.msra.mxu0 0.0
    %1443 = vmatprep.subr.mxu0 0.0
    %1444 = vmatpush1.msra.mxu0 0.0
    %1445 = vmatprep.subr.mxu0 0.0
    %1446 = vmatpush1.msra.mxu0 0.0
    %1447 = vmatprep.subr.mxu0 0.0
    %1448 = vmatpush1.msra.mxu0 0.0
    %1449 = vmatprep.subr.mxu0 0.0
    %1450 = vmatpush1.msra.mxu0 %v222
    %1451 = vmatprep.subr.mxu0 0.0
    %1452 = vmatpush1.msra.mxu0 %v221
    %1453 = vmatprep.subr.mxu0 0.0
    %1454 = vmatpush1.msra.mxu0 %v220
    %1455 = vmatprep.subr.mxu0 0.0
    %1456 = vmatpush1.msra.mxu0 %v219
    %1457 = vmatprep.subr.mxu0 0.0
    %1458 = vmatpush2.msra.mxu0 0.0
    %1459 = vmatprep.subr.mxu0 0.0
    %1460 = vmatpush2.msra.mxu0 0.0
    %1461 = vmatprep.subr.mxu0 0.0
    %1462 = vmatpush2.msra.mxu0 0.0
    %1463 = vmatprep.subr.mxu0 0.0
    %1464 = vmatpush2.msra.mxu0 0.0
    %1465 = vmatprep.subr.mxu0 0.0
    %1466 = vmatpush2.msra.mxu0 0.0
    %1467 = vmatprep.subr.mxu0 0.0
    %1468 = vmatpush2.msra.mxu0 0.0
    %1469 = vmatprep.subr.mxu0 0.0
    %1470 = vmatpush2.msra.mxu0 0.0
    %1471 = vmatprep.subr.mxu0 0.0
    %1472 = vmatpush2.msra.mxu0 0.0
    %1473 = vmatprep.subr.mxu0 0.0
    %1474 = vmatpush2.msra.mxu0 0.0
    %1475 = vmatprep.subr.mxu0 0.0
    %1476 = vmatpush2.msra.mxu0 0.0
    %1477 = vmatprep.subr.mxu0 0.0
    %1478 = vmatpush2.msra.mxu0 0.0
    %1479 = vmatprep.subr.mxu0 0.0
    %1480 = vmatpush2.msra.mxu0 0.0
    %1481 = vmatprep.subr.mxu0 0.0
    %1482 = vmatpush2.msra.mxu0 0.0
    %1483 = vmatprep.subr.mxu0 0.0
    %1484 = vmatpush2.msra.mxu0 0.0
    %1485 = vmatprep.subr.mxu0 0.0
    %1486 = vmatpush2.msra.mxu0 0.0
    %1487 = vmatprep.subr.mxu0 0.0
    %1488 = vmatpush2.msra.mxu0 0.0
    %1489 = vmatprep.mubr.f32.mxu0 0.0
    %1490 = vmatmul.mubr.f32.gmra.mxu0 %v1423
    %v1491 = vpop.f32.mrf.mxu0
    %v1492 = vadd.f32 0.0, %v1491
    %v1493 = vpop.f32.mrf.mxu0
    %1494 = vdwg.mxu0
    %v1495 = vadd.f32 %v167, %v1492
    %v1496 = vxor.u32 %v1419, 2147483648
    %v1497 = vmul.f32 %v1496, 1.442695
    %v1498 = vpow.pop %v1497
    %v1499 = vadd.f32 %v1498, 1.0
    %v1500 = vrcp.pop %v1499
    %v1501 = vmul.f32 1.0, %v1500
    %v1502 = vtanh.pop %v1419
    %v1503 = vxor.u32 %v1495, 2147483648
    %v1504 = vmul.f32 %v1503, 1.442695
    %v1505 = vpow.pop %v1504
    %v1506 = vadd.f32 %v1505, 1.0
    %v1507 = vrcp.pop %v1506
    %v1508 = vmul.f32 1.0, %v1507
    %v1509 = vtanh.pop %v1495
    %v1510 = vmul.f32 %v1501, %v1313
    %1512 = vrot.lane.b32.xlu0 %v1502, 64
    %v1513 = vpop.permute.xlu0 %1512
    %v1515 = vmul.f32 %v1501, %v1513
    %1517 = vrot.lane.b32.xlu0 %v1515, 32
    %v1518 = vpop.permute.xlu0 %1517
    %v1520 = vadd.f32 %v1510, %v1518
    %v1521 = vmul.f32 %v1520, %v881
    %v1522 = vtanh.pop %v1521
    %1524 = vrot.lane.b32.xlu0 %v1522, 64
    %v1525 = vpop.permute.xlu0 %1524
    %v1527 = vmul.f32 %v1501, %v1525
    %v1528 = vmul.f32 %v1527, %v891
    %v1529 = vmul.f32 %v1508, %v1332
    %1531 = vrot.lane.b32.xlu0 %v1509, 64
    %v1532 = vpop.permute.xlu0 %1531
    %v1534 = vmul.f32 %v1508, %v1532
    %1536 = vrot.lane.b32.xlu0 %v1534, 32
    %v1537 = vpop.permute.xlu0 %1536
    %v1539 = vadd.f32 %v1529, %v1537
    %v1540 = vmul.f32 %v1539, %v855
    %v1541 = vtanh.pop %v1540
    %1543 = vrot.lane.b32.xlu0 %v1541, 64
    %v1544 = vpop.permute.xlu0 %1543
    %v1546 = vmul.f32 %v1508, %v1544
    %v1547 = vmul.f32 %v1546, %v865
    %v1548 = vadd.f32 %v1528, %v902
    %v1549 = vmax.f32 %v1341, %v1548
    %v1550 = vadd.f32 %v1547, %v896
    %v1551 = vmax.f32 %v1343, %v1550
    %1553 = vrot.lane.b32.xlu0 %v1528, 32
    %v1554 = vpop.permute.xlu0 %1553
    %v1555 = vsel %vm61, %v1554, 0
    %1557 = vmatprep.subr.mxu0 0.0
    %1558 = vmatpush1.msra.mxu0 0.0
    %1559 = vmatprep.subr.mxu0 0.0
    %1560 = vmatpush1.msra.mxu0 0.0
    %1561 = vmatprep.subr.mxu0 0.0
    %1562 = vmatpush1.msra.mxu0 0.0
    %1563 = vmatprep.subr.mxu0 0.0
    %1564 = vmatpush1.msra.mxu0 0.0
    %1565 = vmatprep.subr.mxu0 0.0
    %1566 = vmatpush1.msra.mxu0 0.0
    %1567 = vmatprep.subr.mxu0 0.0
    %1568 = vmatpush1.msra.mxu0 0.0
    %1569 = vmatprep.subr.mxu0 0.0
    %1570 = vmatpush1.msra.mxu0 0.0
    %1571 = vmatprep.subr.mxu0 0.0
    %1572 = vmatpush1.msra.mxu0 0.0
    %1573 = vmatprep.subr.mxu0 0.0
    %1574 = vmatpush1.msra.mxu0 0.0
    %1575 = vmatprep.subr.mxu0 0.0
    %1576 = vmatpush1.msra.mxu0 0.0
    %1577 = vmatprep.subr.mxu0 0.0
    %1578 = vmatpush1.msra.mxu0 0.0
    %1579 = vmatprep.subr.mxu0 0.0
    %1580 = vmatpush1.msra.mxu0 0.0
    %1581 = vmatprep.subr.mxu0 0.0
    %1582 = vmatpush1.msra.mxu0 %v218
    %1583 = vmatprep.subr.mxu0 0.0
    %1584 = vmatpush1.msra.mxu0 %v217
    %1585 = vmatprep.subr.mxu0 0.0
    %1586 = vmatpush1.msra.mxu0 %v216
    %1587 = vmatprep.subr.mxu0 0.0
    %1588 = vmatpush1.msra.mxu0 %v215
    %1589 = vmatprep.subr.mxu0 0.0
    %1590 = vmatpush2.msra.mxu0 0.0
    %1591 = vmatprep.subr.mxu0 0.0
    %1592 = vmatpush2.msra.mxu0 0.0
    %1593 = vmatprep.subr.mxu0 0.0
    %1594 = vmatpush2.msra.mxu0 0.0
    %1595 = vmatprep.subr.mxu0 0.0
    %1596 = vmatpush2.msra.mxu0 0.0
    %1597 = vmatprep.subr.mxu0 0.0
    %1598 = vmatpush2.msra.mxu0 0.0
    %1599 = vmatprep.subr.mxu0 0.0
    %1600 = vmatpush2.msra.mxu0 0.0
    %1601 = vmatprep.subr.mxu0 0.0
    %1602 = vmatpush2.msra.mxu0 0.0
    %1603 = vmatprep.subr.mxu0 0.0
    %1604 = vmatpush2.msra.mxu0 0.0
    %1605 = vmatprep.subr.mxu0 0.0
    %1606 = vmatpush2.msra.mxu0 0.0
    %1607 = vmatprep.subr.mxu0 0.0
    %1608 = vmatpush2.msra.mxu0 0.0
    %1609 = vmatprep.subr.mxu0 0.0
    %1610 = vmatpush2.msra.mxu0 0.0
    %1611 = vmatprep.subr.mxu0 0.0
    %1612 = vmatpush2.msra.mxu0 0.0
    %1613 = vmatprep.subr.mxu0 0.0
    %1614 = vmatpush2.msra.mxu0 0.0
    %1615 = vmatprep.subr.mxu0 0.0
    %1616 = vmatpush2.msra.mxu0 0.0
    %1617 = vmatprep.subr.mxu0 0.0
    %1618 = vmatpush2.msra.mxu0 0.0
    %1619 = vmatprep.subr.mxu0 0.0
    %1620 = vmatpush2.msra.mxu0 0.0
    %1621 = vmatprep.mubr.f32.mxu0 0.0
    %1622 = vmatmul.mubr.f32.gmra.mxu0 %v1555
    %v1623 = vpop.f32.mrf.mxu0
    %v1624 = vadd.f32 0.0, %v1623
    %v1625 = vpop.f32.mrf.mxu0
    %1626 = vdwg.mxu0
    %v1627 = vadd.f32 %v189, %v1624
    %1629 = vrot.lane.b32.xlu0 %v1547, 32
    %v1630 = vpop.permute.xlu0 %1629
    %v1631 = vsel %vm61, %v1630, 0
    %1633 = vmatprep.subr.mxu0 0.0
    %1634 = vmatpush1.msra.mxu0 0.0
    %1635 = vmatprep.subr.mxu0 0.0
    %1636 = vmatpush1.msra.mxu0 0.0
    %1637 = vmatprep.subr.mxu0 0.0
    %1638 = vmatpush1.msra.mxu0 0.0
    %1639 = vmatprep.subr.mxu0 0.0
    %1640 = vmatpush1.msra.mxu0 0.0
    %1641 = vmatprep.subr.mxu0 0.0
    %1642 = vmatpush1.msra.mxu0 0.0
    %1643 = vmatprep.subr.mxu0 0.0
    %1644 = vmatpush1.msra.mxu0 0.0
    %1645 = vmatprep.subr.mxu0 0.0
    %1646 = vmatpush1.msra.mxu0 0.0
    %1647 = vmatprep.subr.mxu0 0.0
    %1648 = vmatpush1.msra.mxu0 0.0
    %1649 = vmatprep.subr.mxu0 0.0
    %1650 = vmatpush1.msra.mxu0 0.0
    %1651 = vmatprep.subr.mxu0 0.0
    %1652 = vmatpush1.msra.mxu0 0.0
    %1653 = vmatprep.subr.mxu0 0.0
    %1654 = vmatpush1.msra.mxu0 0.0
    %1655 = vmatprep.subr.mxu0 0.0
    %1656 = vmatpush1.msra.mxu0 0.0
    %1657 = vmatprep.subr.mxu0 0.0
    %1658 = vmatpush1.msra.mxu0 %v222
    %1659 = vmatprep.subr.mxu0 0.0
    %1660 = vmatpush1.msra.mxu0 %v221
    %1661 = vmatprep.subr.mxu0 0.0
    %1662 = vmatpush1.msra.mxu0 %v220
    %1663 = vmatprep.subr.mxu0 0.0
    %1664 = vmatpush1.msra.mxu0 %v219
    %1665 = vmatprep.subr.mxu0 0.0
    %1666 = vmatpush2.msra.mxu0 0.0
    %1667 = vmatprep.subr.mxu0 0.0
    %1668 = vmatpush2.msra.mxu0 0.0
    %1669 = vmatprep.subr.mxu0 0.0
    %1670 = vmatpush2.msra.mxu0 0.0
    %1671 = vmatprep.subr.mxu0 0.0
    %1672 = vmatpush2.msra.mxu0 0.0
    %1673 = vmatprep.subr.mxu0 0.0
    %1674 = vmatpush2.msra.mxu0 0.0
    %1675 = vmatprep.subr.mxu0 0.0
    %1676 = vmatpush2.msra.mxu0 0.0
    %1677 = vmatprep.subr.mxu0 0.0
    %1678 = vmatpush2.msra.mxu0 0.0
    %1679 = vmatprep.subr.mxu0 0.0
    %1680 = vmatpush2.msra.mxu0 0.0
    %1681 = vmatprep.subr.mxu0 0.0
    %1682 = vmatpush2.msra.mxu0 0.0
    %1683 = vmatprep.subr.mxu0 0.0
    %1684 = vmatpush2.msra.mxu0 0.0
    %1685 = vmatprep.subr.mxu0 0.0
    %1686 = vmatpush2.msra.mxu0 0.0
    %1687 = vmatprep.subr.mxu0 0.0
    %1688 = vmatpush2.msra.mxu0 0.0
    %1689 = vmatprep.subr.mxu0 0.0
    %1690 = vmatpush2.msra.mxu0 0.0
    %1691 = vmatprep.subr.mxu0 0.0
    %1692 = vmatpush2.msra.mxu0 0.0
    %1693 = vmatprep.subr.mxu0 0.0
    %1694 = vmatpush2.msra.mxu0 0.0
    %1695 = vmatprep.subr.mxu0 0.0
    %1696 = vmatpush2.msra.mxu0 0.0
    %1697 = vmatprep.mubr.f32.mxu0 0.0
    %1698 = vmatmul.mubr.f32.gmra.mxu0 %v1631
    %v1699 = vpop.f32.mrf.mxu0
    %v1700 = vadd.f32 0.0, %v1699
    %v1701 = vpop.f32.mrf.mxu0
    %1702 = vdwg.mxu0
    %v1703 = vadd.f32 %v161, %v1700
    %v1704 = vxor.u32 %v1627, 2147483648
    %v1705 = vmul.f32 %v1704, 1.442695
    %v1706 = vpow.pop %v1705
    %v1707 = vadd.f32 %v1706, 1.0
    %v1708 = vrcp.pop %v1707
    %v1709 = vmul.f32 1.0, %v1708
    %v1710 = vtanh.pop %v1627
    %v1711 = vxor.u32 %v1703, 2147483648
    %v1712 = vmul.f32 %v1711, 1.442695
    %v1713 = vpow.pop %v1712
    %v1714 = vadd.f32 %v1713, 1.0
    %v1715 = vrcp.pop %v1714
    %v1716 = vmul.f32 1.0, %v1715
    %v1717 = vtanh.pop %v1703
    %v1718 = vmul.f32 %v1709, %v1521
    %1720 = vrot.lane.b32.xlu0 %v1710, 64
    %v1721 = vpop.permute.xlu0 %1720
    %v1723 = vmul.f32 %v1709, %v1721
    %1725 = vrot.lane.b32.xlu0 %v1723, 32
    %v1726 = vpop.permute.xlu0 %1725
    %v1728 = vadd.f32 %v1718, %v1726
    %v1729 = vmul.f32 %v1728, %v651
    %v1730 = vtanh.pop %v1729
    %1732 = vrot.lane.b32.xlu0 %v1730, 64
    %v1733 = vpop.permute.xlu0 %1732
    %v1735 = vmul.f32 %v1709, %v1733
    %v1736 = vmul.f32 %v1735, %v661
    %v1737 = vmul.f32 %v1716, %v1540
    %1739 = vrot.lane.b32.xlu0 %v1717, 64
    %v1740 = vpop.permute.xlu0 %1739
    %v1742 = vmul.f32 %v1716, %v1740
    %1744 = vrot.lane.b32.xlu0 %v1742, 32
    %v1745 = vpop.permute.xlu0 %1744
    %v1747 = vadd.f32 %v1737, %v1745
    %v1748 = vmul.f32 %v1747, %v625
    %v1749 = vtanh.pop %v1748
    %1751 = vrot.lane.b32.xlu0 %v1749, 64
    %v1752 = vpop.permute.xlu0 %1751
    %v1754 = vmul.f32 %v1716, %v1752
    %v1755 = vmul.f32 %v1754, %v635
    %v1756 = vadd.f32 %v1736, %v672
    %v1757 = vmax.f32 %v1549, %v1756
    %v1758 = vadd.f32 %v1755, %v666
    %v1759 = vmax.f32 %v1551, %v1758
    %1761 = vrot.lane.b32.xlu0 %v1736, 32
    %v1762 = vpop.permute.xlu0 %1761
    %v1763 = vsel %vm61, %v1762, 0
    %1765 = vmatprep.subr.mxu0 0.0
    %1766 = vmatpush1.msra.mxu0 0.0
    %1767 = vmatprep.subr.mxu0 0.0
    %1768 = vmatpush1.msra.mxu0 0.0
    %1769 = vmatprep.subr.mxu0 0.0
    %1770 = vmatpush1.msra.mxu0 0.0
    %1771 = vmatprep.subr.mxu0 0.0
    %1772 = vmatpush1.msra.mxu0 0.0
    %1773 = vmatprep.subr.mxu0 0.0
    %1774 = vmatpush1.msra.mxu0 0.0
    %1775 = vmatprep.subr.mxu0 0.0
    %1776 = vmatpush1.msra.mxu0 0.0
    %1777 = vmatprep.subr.mxu0 0.0
    %1778 = vmatpush1.msra.mxu0 0.0
    %1779 = vmatprep.subr.mxu0 0.0
    %1780 = vmatpush1.msra.mxu0 0.0
    %1781 = vmatprep.subr.mxu0 0.0
    %1782 = vmatpush1.msra.mxu0 0.0
    %1783 = vmatprep.subr.mxu0 0.0
    %1784 = vmatpush1.msra.mxu0 0.0
    %1785 = vmatprep.subr.mxu0 0.0
    %1786 = vmatpush1.msra.mxu0 0.0
    %1787 = vmatprep.subr.mxu0 0.0
    %1788 = vmatpush1.msra.mxu0 0.0
    %1789 = vmatprep.subr.mxu0 0.0
    %1790 = vmatpush1.msra.mxu0 %v218
    %1791 = vmatprep.subr.mxu0 0.0
    %1792 = vmatpush1.msra.mxu0 %v217
    %1793 = vmatprep.subr.mxu0 0.0
    %1794 = vmatpush1.msra.mxu0 %v216
    %1795 = vmatprep.subr.mxu0 0.0
    %1796 = vmatpush1.msra.mxu0 %v215
    %1797 = vmatprep.subr.mxu0 0.0
    %1798 = vmatpush2.msra.mxu0 0.0
    %1799 = vmatprep.subr.mxu0 0.0
    %1800 = vmatpush2.msra.mxu0 0.0
    %1801 = vmatprep.subr.mxu0 0.0
    %1802 = vmatpush2.msra.mxu0 0.0
    %1803 = vmatprep.subr.mxu0 0.0
    %1804 = vmatpush2.msra.mxu0 0.0
    %1805 = vmatprep.subr.mxu0 0.0
    %1806 = vmatpush2.msra.mxu0 0.0
    %1807 = vmatprep.subr.mxu0 0.0
    %1808 = vmatpush2.msra.mxu0 0.0
    %1809 = vmatprep.subr.mxu0 0.0
    %1810 = vmatpush2.msra.mxu0 0.0
    %1811 = vmatprep.subr.mxu0 0.0
    %1812 = vmatpush2.msra.mxu0 0.0
    %1813 = vmatprep.subr.mxu0 0.0
    %1814 = vmatpush2.msra.mxu0 0.0
    %1815 = vmatprep.subr.mxu0 0.0
    %1816 = vmatpush2.msra.mxu0 0.0
    %1817 = vmatprep.subr.mxu0 0.0
    %1818 = vmatpush2.msra.mxu0 0.0
    %1819 = vmatprep.subr.mxu0 0.0
    %1820 = vmatpush2.msra.mxu0 0.0
    %1821 = vmatprep.subr.mxu0 0.0
    %1822 = vmatpush2.msra.mxu0 0.0
    %1823 = vmatprep.subr.mxu0 0.0
    %1824 = vmatpush2.msra.mxu0 0.0
    %1825 = vmatprep.subr.mxu0 0.0
    %1826 = vmatpush2.msra.mxu0 0.0
    %1827 = vmatprep.subr.mxu0 0.0
    %1828 = vmatpush2.msra.mxu0 0.0
    %1829 = vmatprep.mubr.f32.mxu0 0.0
    %1830 = vmatmul.mubr.f32.gmra.mxu0 %v1763
    %v1831 = vpop.f32.mrf.mxu0
    %v1832 = vadd.f32 0.0, %v1831
    %v1833 = vpop.f32.mrf.mxu0
    %1834 = vdwg.mxu0
    %v1835 = vadd.f32 %v195, %v1832
    %1837 = vrot.lane.b32.xlu0 %v1755, 32
    %v1838 = vpop.permute.xlu0 %1837
    %v1839 = vsel %vm61, %v1838, 0
    %1841 = vmatprep.subr.mxu0 0.0
    %1842 = vmatpush1.msra.mxu0 0.0
    %1843 = vmatprep.subr.mxu0 0.0
    %1844 = vmatpush1.msra.mxu0 0.0
    %1845 = vmatprep.subr.mxu0 0.0
    %1846 = vmatpush1.msra.mxu0 0.0
    %1847 = vmatprep.subr.mxu0 0.0
    %1848 = vmatpush1.msra.mxu0 0.0
    %1849 = vmatprep.subr.mxu0 0.0
    %1850 = vmatpush1.msra.mxu0 0.0
    %1851 = vmatprep.subr.mxu0 0.0
    %1852 = vmatpush1.msra.mxu0 0.0
    %1853 = vmatprep.subr.mxu0 0.0
    %1854 = vmatpush1.msra.mxu0 0.0
    %1855 = vmatprep.subr.mxu0 0.0
    %1856 = vmatpush1.msra.mxu0 0.0
    %1857 = vmatprep.subr.mxu0 0.0
    %1858 = vmatpush1.msra.mxu0 0.0
    %1859 = vmatprep.subr.mxu0 0.0
    %1860 = vmatpush1.msra.mxu0 0.0
    %1861 = vmatprep.subr.mxu0 0.0
    %1862 = vmatpush1.msra.mxu0 0.0
    %1863 = vmatprep.subr.mxu0 0.0
    %1864 = vmatpush1.msra.mxu0 0.0
    %1865 = vmatprep.subr.mxu0 0.0
    %1866 = vmatpush1.msra.mxu0 %v222
    %1867 = vmatprep.subr.mxu0 0.0
    %1868 = vmatpush1.msra.mxu0 %v221
    %1869 = vmatprep.subr.mxu0 0.0
    %1870 = vmatpush1.msra.mxu0 %v220
    %1871 = vmatprep.subr.mxu0 0.0
    %1872 = vmatpush1.msra.mxu0 %v219
    %1873 = vmatprep.subr.mxu0 0.0
    %1874 = vmatpush2.msra.mxu0 0.0
    %1875 = vmatprep.subr.mxu0 0.0
    %1876 = vmatpush2.msra.mxu0 0.0
    %1877 = vmatprep.subr.mxu0 0.0
    %1878 = vmatpush2.msra.mxu0 0.0
    %1879 = vmatprep.subr.mxu0 0.0
    %1880 = vmatpush2.msra.mxu0 0.0
    %1881 = vmatprep.subr.mxu0 0.0
    %1882 = vmatpush2.msra.mxu0 0.0
    %1883 = vmatprep.subr.mxu0 0.0
    %1884 = vmatpush2.msra.mxu0 0.0
    %1885 = vmatprep.subr.mxu0 0.0
    %1886 = vmatpush2.msra.mxu0 0.0
    %1887 = vmatprep.subr.mxu0 0.0
    %1888 = vmatpush2.msra.mxu0 0.0
    %1889 = vmatprep.subr.mxu0 0.0
    %1890 = vmatpush2.msra.mxu0 0.0
    %1891 = vmatprep.subr.mxu0 0.0
    %1892 = vmatpush2.msra.mxu0 0.0
    %1893 = vmatprep.subr.mxu0 0.0
    %1894 = vmatpush2.msra.mxu0 0.0
    %1895 = vmatprep.subr.mxu0 0.0
    %1896 = vmatpush2.msra.mxu0 0.0
    %1897 = vmatprep.subr.mxu0 0.0
    %1898 = vmatpush2.msra.mxu0 0.0
    %1899 = vmatprep.subr.mxu0 0.0
    %1900 = vmatpush2.msra.mxu0 0.0
    %1901 = vmatprep.subr.mxu0 0.0
    %1902 = vmatpush2.msra.mxu0 0.0
    %1903 = vmatprep.subr.mxu0 0.0
    %1904 = vmatpush2.msra.mxu0 0.0
    %1905 = vmatprep.mubr.f32.mxu0 0.0
    %1906 = vmatmul.mubr.f32.gmra.mxu0 %v1839
    %v1907 = vpop.f32.mrf.mxu0
    %v1908 = vadd.f32 0.0, %v1907
    %v1909 = vpop.f32.mrf.mxu0
    %1910 = vdwg.mxu0
    %v1911 = vadd.f32 %v155, %v1908
    %v1912 = vxor.u32 %v1835, 2147483648
    %v1913 = vmul.f32 %v1912, 1.442695
    %v1914 = vpow.pop %v1913
    %v1915 = vadd.f32 %v1914, 1.0
    %v1916 = vrcp.pop %v1915
    %v1917 = vmul.f32 1.0, %v1916
    %v1918 = vtanh.pop %v1835
    %v1919 = vxor.u32 %v1911, 2147483648
    %v1920 = vmul.f32 %v1919, 1.442695
    %v1921 = vpow.pop %v1920
    %v1922 = vadd.f32 %v1921, 1.0
    %v1923 = vrcp.pop %v1922
    %v1924 = vmul.f32 1.0, %v1923
    %v1925 = vtanh.pop %v1911
    %v1926 = vmul.f32 %v1917, %v1729
    %1928 = vrot.lane.b32.xlu0 %v1918, 64
    %v1929 = vpop.permute.xlu0 %1928
    %v1931 = vmul.f32 %v1917, %v1929
    %1933 = vrot.lane.b32.xlu0 %v1931, 32
    %v1934 = vpop.permute.xlu0 %1933
    %v1936 = vadd.f32 %v1926, %v1934
    %v1937 = vmul.f32 %v1936, %v421
    %v1938 = vtanh.pop %v1937
    %1940 = vrot.lane.b32.xlu0 %v1938, 64
    %v1941 = vpop.permute.xlu0 %1940
    %v1943 = vmul.f32 %v1917, %v1941
    %v1944 = vmul.f32 %v1943, %v431
    %v1945 = vmul.f32 %v1924, %v1748
    %1947 = vrot.lane.b32.xlu0 %v1925, 64
    %v1948 = vpop.permute.xlu0 %1947
    %v1950 = vmul.f32 %v1924, %v1948
    %1952 = vrot.lane.b32.xlu0 %v1950, 32
    %v1953 = vpop.permute.xlu0 %1952
    %v1955 = vadd.f32 %v1945, %v1953
    %v1956 = vmul.f32 %v1955, %v395
    %v1957 = vtanh.pop %v1956
    %1959 = vrot.lane.b32.xlu0 %v1957, 64
    %v1960 = vpop.permute.xlu0 %1959
    %v1962 = vmul.f32 %v1924, %v1960
    %v1963 = vmul.f32 %v1962, %v405
    %v1964 = vadd.f32 %v1944, %v442
    %v1965 = vmax.f32 %v1757, %v1964
    %v1966 = vadd.f32 %v1963, %v436
    %v1967 = vmax.f32 %v1759, %v1966
    %v1968 = vld [vmem:[%s7] sm:$0xff]
    %v1969 = vld [vmem:[%s7 + $0x8] sm:$0xff]
    %v1970 = vld [vmem:[%s7 + $0x10] sm:$0xff]
    %v1971 = vld [vmem:[%s7 + $0x18] sm:$0xff]
    %v1972 = vld [vmem:[%s8] sm:$0xff]
    %v1973 = vld [vmem:[%s8 + $0x8] sm:$0xff]
    %v1974 = vld [vmem:[%s8 + $0x10] sm:$0xff]
    %v1975 = vld [vmem:[%s8 + $0x18] sm:$0xff]
    %1977 = vrot.lane.b32.xlu0 %v1967, 32
    %v1978 = vpop.permute.xlu0 %1977
    %v1979 = vsel %vm61, %v1978, 0
    %1981 = vmatprep.subr.mxu0 0.0
    %1982 = vmatpush1.msra.mxu0 0.0
    %1983 = vmatprep.subr.mxu0 0.0
    %1984 = vmatpush1.msra.mxu0 0.0
    %1985 = vmatprep.subr.mxu0 0.0
    %1986 = vmatpush1.msra.mxu0 0.0
    %1987 = vmatprep.subr.mxu0 0.0
    %1988 = vmatpush1.msra.mxu0 0.0
    %1989 = vmatprep.subr.mxu0 0.0
    %1990 = vmatpush1.msra.mxu0 0.0
    %1991 = vmatprep.subr.mxu0 0.0
    %1992 = vmatpush1.msra.mxu0 0.0
    %1993 = vmatprep.subr.mxu0 0.0
    %1994 = vmatpush1.msra.mxu0 0.0
    %1995 = vmatprep.subr.mxu0 0.0
    %1996 = vmatpush1.msra.mxu0 0.0
    %1997 = vmatprep.subr.mxu0 0.0
    %1998 = vmatpush1.msra.mxu0 0.0
    %1999 = vmatprep.subr.mxu0 0.0
    %2000 = vmatpush1.msra.mxu0 0.0
    %2001 = vmatprep.subr.mxu0 0.0
    %2002 = vmatpush1.msra.mxu0 0.0
    %2003 = vmatprep.subr.mxu0 0.0
    %2004 = vmatpush1.msra.mxu0 0.0
    %2005 = vmatprep.subr.mxu0 0.0
    %2006 = vmatpush1.msra.mxu0 %v1975
    %2007 = vmatprep.subr.mxu0 0.0
    %2008 = vmatpush1.msra.mxu0 %v1974
    %2009 = vmatprep.subr.mxu0 0.0
    %2010 = vmatpush1.msra.mxu0 %v1973
    %2011 = vmatprep.subr.mxu0 0.0
    %2012 = vmatpush1.msra.mxu0 %v1972
    %2013 = vmatprep.subr.mxu0 0.0
    %2014 = vmatpush2.msra.mxu0 0.0
    %2015 = vmatprep.subr.mxu0 0.0
    %2016 = vmatpush2.msra.mxu0 0.0
    %2017 = vmatprep.subr.mxu0 0.0
    %2018 = vmatpush2.msra.mxu0 0.0
    %2019 = vmatprep.subr.mxu0 0.0
    %2020 = vmatpush2.msra.mxu0 0.0
    %2021 = vmatprep.subr.mxu0 0.0
    %2022 = vmatpush2.msra.mxu0 0.0
    %2023 = vmatprep.subr.mxu0 0.0
    %2024 = vmatpush2.msra.mxu0 0.0
    %2025 = vmatprep.subr.mxu0 0.0
    %2026 = vmatpush2.msra.mxu0 0.0
    %2027 = vmatprep.subr.mxu0 0.0
    %2028 = vmatpush2.msra.mxu0 0.0
    %2029 = vmatprep.subr.mxu0 0.0
    %2030 = vmatpush2.msra.mxu0 0.0
    %2031 = vmatprep.subr.mxu0 0.0
    %2032 = vmatpush2.msra.mxu0 0.0
    %2033 = vmatprep.subr.mxu0 0.0
    %2034 = vmatpush2.msra.mxu0 0.0
    %2035 = vmatprep.subr.mxu0 0.0
    %2036 = vmatpush2.msra.mxu0 0.0
    %2037 = vmatprep.subr.mxu0 0.0
    %2038 = vmatpush2.msra.mxu0 0.0
    %2039 = vmatprep.subr.mxu0 0.0
    %2040 = vmatpush2.msra.mxu0 0.0
    %2041 = vmatprep.subr.mxu0 0.0
    %2042 = vmatpush2.msra.mxu0 0.0
    %2043 = vmatprep.subr.mxu0 0.0
    %2044 = vmatpush2.msra.mxu0 0.0
    %2045 = vmatprep.mubr.f32.mxu0 0.0
    %2046 = vmatmul.mubr.f32.gmra.mxu0 %v1979
    %v2047 = vpop.f32.mrf.mxu0
    %v2048 = vadd.f32 0.0, %v2047
    %v2049 = vpop.f32.mrf.mxu0
    %2050 = vdwg.mxu0
    %2052 = vrot.lane.b32.xlu0 %v1965, 32
    %v2053 = vpop.permute.xlu0 %2052
    %v2054 = vsel %vm61, %v2053, 0
    %2056 = vmatprep.subr.mxu0 0.0
    %2057 = vmatpush1.msra.mxu0 0.0
    %2058 = vmatprep.subr.mxu0 0.0
    %2059 = vmatpush1.msra.mxu0 0.0
    %2060 = vmatprep.subr.mxu0 0.0
    %2061 = vmatpush1.msra.mxu0 0.0
    %2062 = vmatprep.subr.mxu0 0.0
    %2063 = vmatpush1.msra.mxu0 0.0
    %2064 = vmatprep.subr.mxu0 0.0
    %2065 = vmatpush1.msra.mxu0 0.0
    %2066 = vmatprep.subr.mxu0 0.0
    %2067 = vmatpush1.msra.mxu0 0.0
    %2068 = vmatprep.subr.mxu0 0.0
    %2069 = vmatpush1.msra.mxu0 0.0
    %2070 = vmatprep.subr.mxu0 0.0
    %2071 = vmatpush1.msra.mxu0 0.0
    %2072 = vmatprep.subr.mxu0 0.0
    %2073 = vmatpush1.msra.mxu0 0.0
    %2074 = vmatprep.subr.mxu0 0.0
    %2075 = vmatpush1.msra.mxu0 0.0
    %2076 = vmatprep.subr.mxu0 0.0
    %2077 = vmatpush1.msra.mxu0 0.0
    %2078 = vmatprep.subr.mxu0 0.0
    %2079 = vmatpush1.msra.mxu0 0.0
    %2080 = vmatprep.subr.mxu0 0.0
    %2081 = vmatpush1.msra.mxu0 %v1971
    %2082 = vmatprep.subr.mxu0 0.0
    %2083 = vmatpush1.msra.mxu0 %v1970
    %2084 = vmatprep.subr.mxu0 0.0
    %2085 = vmatpush1.msra.mxu0 %v1969
    %2086 = vmatprep.subr.mxu0 0.0
    %2087 = vmatpush1.msra.mxu0 %v1968
    %2088 = vmatprep.subr.mxu0 0.0
    %2089 = vmatpush2.msra.mxu0 0.0
    %2090 = vmatprep.subr.mxu0 0.0
    %2091 = vmatpush2.msra.mxu0 0.0
    %2092 = vmatprep.subr.mxu0 0.0
    %2093 = vmatpush2.msra.mxu0 0.0
    %2094 = vmatprep.subr.mxu0 0.0
    %2095 = vmatpush2.msra.mxu0 0.0
    %2096 = vmatprep.subr.mxu0 0.0
    %2097 = vmatpush2.msra.mxu0 0.0
    %2098 = vmatprep.subr.mxu0 0.0
    %2099 = vmatpush2.msra.mxu0 0.0
    %2100 = vmatprep.subr.mxu0 0.0
    %2101 = vmatpush2.msra.mxu0 0.0
    %2102 = vmatprep.subr.mxu0 0.0
    %2103 = vmatpush2.msra.mxu0 0.0
    %2104 = vmatprep.subr.mxu0 0.0
    %2105 = vmatpush2.msra.mxu0 0.0
    %2106 = vmatprep.subr.mxu0 0.0
    %2107 = vmatpush2.msra.mxu0 0.0
    %2108 = vmatprep.subr.mxu0 0.0
    %2109 = vmatpush2.msra.mxu0 0.0
    %2110 = vmatprep.subr.mxu0 0.0
    %2111 = vmatpush2.msra.mxu0 0.0
    %2112 = vmatprep.subr.mxu0 0.0
    %2113 = vmatpush2.msra.mxu0 0.0
    %2114 = vmatprep.subr.mxu0 0.0
    %2115 = vmatpush2.msra.mxu0 0.0
    %2116 = vmatprep.subr.mxu0 0.0
    %2117 = vmatpush2.msra.mxu0 0.0
    %2118 = vmatprep.subr.mxu0 0.0
    %2119 = vmatpush2.msra.mxu0 0.0
    %2120 = vmatprep.mubr.f32.mxu0 0.0
    %2121 = vmatmul.mubr.f32.gmra.mxu0 %v2054
    %v2122 = vpop.f32.mrf.mxu0
    %v2123 = vadd.f32 %v2048, %v2122
    %v2124 = vpop.f32.mrf.mxu0
    %2125 = vdwg.mxu0
    %vm2126 = vcmask 64512
    %2127 = vst.msk [vmem:[#allocation2] sm:$0xff] %vm2126, %v2123
    // Predicated region
    $region38: #{tpu_custom_call.1} parent=1 // pred_check
      _
    $region39: #{tpu_custom_call.1} parent=1 // pred_check_branch
      %2129 = sbr.rel (0) target = $region41
    $region40: #{tpu_custom_call.1} parent=1 // pred_region
      %s2131 = ssub.s32 128, 128
      %2132 = vsyncadd [#allocation3], %s2131
      %s2134 = sshll.u32 [#allocation2], 4
      %s2135 = int_to_ptr.vmem [resolvable:$true] %s2134
      %2137 = dma.vmem_to_hbm [thread:$0]  %s2135, 128, %s9, [#allocation3]
    $region41: #{tpu_custom_call.1} parent=1 // pred_fallthru
      _
    // Predicated region
    $region42: #{tpu_custom_call.1} parent=1 // pred_check
      _
    $region43: #{tpu_custom_call.1} parent=1 // pred_check_branch
      %2139 = sbr.rel (0) target = $region45
    $region44: #{tpu_custom_call.1} parent=1 // pred_region
      %2140 = dma.done [#allocation3], 128
    $region45: #{tpu_custom_call.1} parent=1 // pred_fallthru
      _
    %2141 = vsyncpa [#allocation3], 1

</llo_original>
